<compile_context>
chip_gen: v5e
topology: v5e:2x2
jax: 0.10.0
libtpu: 0.0.40
codegen_flags: <defaults>
</compile_context>

<pallas_src>
import functools

import jax
import jax.numpy as jnp
from jax import lax
from jax.experimental import pallas as pl
from jax.experimental.pallas import tpu as pltpu

EPS = 1e-5                    # PyTorch LayerNorm default eps


# ---------------------------------------------------------------- helpers ----
def _mm_bf16(a, b):
    """Large GEMMs: bf16 MXU inputs, f32 accumulation."""
    return jnp.dot(a.astype(jnp.bfloat16), b.astype(jnp.bfloat16),
                   preferred_element_type=jnp.float32)


def _mm_f32(a, b):
    """Small projections feeding exp/softplus/scan stay in f32 (numerics)."""
    return jnp.dot(a, b, preferred_element_type=jnp.float32)


def _sigmoid(x):
    # Numerically stable; the divide goes to the EUP via approximate reciprocal.
    e = jnp.exp(-jnp.abs(x))
    r = pl.reciprocal(1.0 + e, approx=True)
    return jnp.where(x >= 0.0, r, e * r)


def _silu(x):
    return x * _sigmoid(x)


def _softplus(x):
    return jnp.maximum(x, 0.0) + jnp.log(1.0 + jnp.exp(-jnp.abs(x)))


def _layernorm(x, g, b):
    mu = jnp.mean(x, axis=-1, keepdims=True)
    var = jnp.mean((x - mu) ** 2, axis=-1, keepdims=True)
    return (x - mu) * lax.rsqrt(var + EPS) * g + b


def _vec_layout(C, d_inner):
    """Packing layout for the small per-layer row-vector parameters."""
    spec = (("ln1_g", C), ("ln1_b", C), ("conv_b", d_inner), ("dtp_b", d_inner),
            ("D", d_inner), ("ln2_g", C), ("ln2_b", C), ("b1", 4 * C), ("b2", C))
    offs, o = {}, 0
    for name, w in spec:
        offs[name] = (o, w)
        o += w
    return spec, offs, o


# ---------------------------------------------------------------- kernels ----
def fused_block_kernel(x_ref, vec_ref, in_w, conv_w, xproj_w, dtp_w, A_ref,
                       out_w, w1, w2, o_ref,
                       decay_scr, inp_scr, c_scr, y_scr,
                       *, Bn, T, d_inner, d_state, d_conv, dt_rank, offs):
    """Whole batch: x1 = x + Mamba(LN1(x)); o = x1 + FFN(LN2(x1))."""
    BT = Bn * T
    N = d_state * d_inner

    def vec(name):                                     # packed row-vector params
        o, w = offs[name]
        return vec_ref[:, o:o + w]                     # (1, w)

    x = x_ref[...]                                     # (B*T, d_model), batch-folded
    u = _layernorm(x, vec("ln1_g"), vec("ln1_b"))

    # ---- in_proj (bias=False): one lane-dense bf16 MXU matmul for x | z.
    xz = _mm_bf16(u, in_w[...])                        # (BT, 2*d_inner)
    xin = xz[:, :d_inner]
    z = xz[:, d_inner:]

    # ---- causal depthwise conv1d, batch-folded: padded copy + shifted static
    #      slices; rows with (t mod T) < lag are masked so batches never leak.
    t_idx = lax.broadcasted_iota(jnp.int32, (BT, d_inner), 0) % T
    xpad = jnp.concatenate(
        [jnp.zeros((d_conv - 1, d_inner), jnp.float32), xin], axis=0)
    cw = conv_w[...]
    acc = jnp.zeros((BT, d_inner), jnp.float32) + vec("conv_b")
    for k in range(d_conv):                            # tiny static unroll
        lag = d_conv - 1 - k                           # tap k reads x[t - lag]
        shifted = xpad[k:k + BT, :]
        if lag > 0:
            shifted = jnp.where(t_idx >= lag, shifted, 0.0)
        acc = acc + shifted * cw[k:k + 1, :]
    xc = _silu(acc)                                    # (BT, d_inner)

    # ---- fused (dt | B | C) projection, dt_proj + softplus (kept f32).
    proj = _mm_f32(xc, xproj_w[...])                   # (BT, dt_rank + 2*d_state)
    dt_raw = proj[:, :dt_rank]
    Bm = proj[:, dt_rank:dt_rank + d_state]            # (BT, d_state)
    Cm = proj[:, dt_rank + d_state:dt_rank + 2 * d_state]
    dt = _softplus(_mm_f32(dt_raw, dtp_w[...]) + vec("dtp_b"))   # (BT, d_inner)

    # ---- selective scan, state flattened onto lanes (col = s*d_inner + j).
    #      decay / input built per state: no E expander, no K=d_state matmuls.
    A = A_ref[...]                                     # (d_state, d_inner) = -exp(A_log)
    dtu = dt * xc
    decay_scr[...] = jnp.concatenate(
        [jnp.exp(dt * A[s:s + 1, :]) for s in range(d_state)], axis=1)
    inp_scr[...] = jnp.concatenate(
        [dtu * Bm[:, s:s + 1] for s in range(d_state)], axis=1)
    c_scr[...] = Cm

    # Recurrence: time-tiled; every scratch access is an aligned (TSCAN, N) tile,
    # the TSCAN steps run on register values, and the C-contraction is fused per
    # tile (no (BT, N) h-history buffer).
    TSCAN = 8 if T % 8 == 0 else 1
    n_tiles = T // TSCAN

    for b in range(Bn):                                # batch folded into one call
        def tile_body(it, h, _b=b):
            base = pl.multiple_of(_b * T + it * TSCAN, TSCAN)
            dec = decay_scr[pl.ds(base, TSCAN), :]     # (TSCAN, N)
            inp = inp_scr[pl.ds(base, TSCAN), :]       # (TSCAN, N)
            ct = c_scr[pl.ds(base, TSCAN), :]          # (TSCAN, d_state)
            rows = []
            for r in range(TSCAN):                     # register-resident steps
                h = dec[r:r + 1, :] * h + inp[r:r + 1, :]
                rows.append(h)
            h_tile = jnp.concatenate(rows, axis=0)     # (TSCAN, N)
            y_t = jnp.zeros((TSCAN, d_inner), jnp.float32)
            for s in range(d_state):                   # fused C-contraction
                y_t = y_t + (h_tile[:, s * d_inner:(s + 1) * d_inner]
                             * ct[:, s:s + 1])
            y_scr[pl.ds(base, TSCAN), :] = y_t
            return h

        lax.fori_loop(0, n_tiles, tile_body, jnp.zeros((1, N), jnp.float32))

    # ---- D skip + z gate + out_proj + residual 1.
    y = (y_scr[...] + xc * vec("D")) * _silu(z)
    x1 = x + _mm_bf16(y, out_w[...])

    # ---- LayerNorm2 + FFN(ReLU) + residual 2 (nn.Dropout is eval-mode identity).
    xn2 = _layernorm(x1, vec("ln2_g"), vec("ln2_b"))
    hfc = jnp.maximum(_mm_bf16(xn2, w1[...]) + vec("b1"), 0.0)
    o_ref[...] = x1 + _mm_bf16(hfc, w2[...]) + vec("b2")


def lm_head_kernel(x_ref, w_ref, b_ref, o_ref):
    o_ref[...] = _mm_bf16(x_ref[...], w_ref[...]) + b_ref[...]


# --------------------------------------------------------------- wrappers ----
def fused_block(x2d, blk, dims, Bn, T):
    BT, C = x2d.shape
    d_inner, d_state = dims["d_inner"], dims["d_state"]
    d_conv, dt_rank = dims["d_conv"], dims["dt_rank"]
    N = d_state * d_inner

    spec, offs, _ = _vec_layout(C, d_inner)
    # Pack the small row-vector params into one input (one DMA instead of nine).
    vec_pack = jnp.concatenate([blk[name] for name, _ in spec], axis=1)
    # Hoisted out of the kernel: A = -exp(A_log).
    A = -jnp.exp(blk["A_log"])
    # Large GEMM weights as bf16 MXU inputs (f32 accumulation inside the kernel).
    in_w = blk["in_w"].astype(jnp.bfloat16)
    out_w = blk["out_w"].astype(jnp.bfloat16)
    w1 = blk["w1"].astype(jnp.bfloat16)
    w2 = blk["w2"].astype(jnp.bfloat16)

    kernel = functools.partial(
        fused_block_kernel, Bn=Bn, T=T, d_inner=d_inner, d_state=d_state,
        d_conv=d_conv, dt_rank=dt_rank, offs=offs)

    ins = [x2d, vec_pack, in_w, blk["conv_w"], blk["xproj_w"], blk["dtp_w"],
           A, out_w, w1, w2]

    def full(a):                     # whole array resident in VMEM, copied once
        return pl.BlockSpec(a.shape, lambda n=a.ndim: (0,) * n)

    return pl.pallas_call(
        kernel,
        out_shape=jax.ShapeDtypeStruct((BT, C), jnp.float32),
        in_specs=[full(a) for a in ins],
        out_specs=full(x2d),
        scratch_shapes=[pltpu.VMEM((BT, N), jnp.float32),        # decay = exp(dt*A)
                        pltpu.VMEM((BT, N), jnp.float32),        # input  = dt*B*u
                        pltpu.VMEM((BT, d_state), jnp.float32),  # C for scan tiles
                        pltpu.VMEM((BT, d_inner), jnp.float32)], # scan output y
        compiler_params=pltpu.CompilerParams(
            vmem_limit_bytes=48 * 1024 * 1024),
    )(*ins)


def lm_head(x2d, w, b, *, row_tile=256, vocab_tile=512):
    M, C = x2d.shape
    V = w.shape[1]
    tm = M if M <= row_tile else row_tile
    tv = V if V <= vocab_tile else vocab_tile
    w = w.astype(jnp.bfloat16)
    return pl.pallas_call(
        lm_head_kernel,
        out_shape=jax.ShapeDtypeStruct((M, V), jnp.float32),
        grid=(pl.cdiv(M, tm), pl.cdiv(V, tv)),
        in_specs=[pl.BlockSpec((tm, C), lambda i, j: (i, 0)),
                  pl.BlockSpec((C, tv), lambda i, j: (0, j)),
                  pl.BlockSpec((1, tv), lambda i, j: (0, j))],
        out_specs=pl.BlockSpec((tm, tv), lambda i, j: (i, j)),
        compiler_params=pltpu.CompilerParams(
            dimension_semantics=("parallel", "parallel")),
    )(x2d, w, b)


# ------------------------------------------------------------------ model ----
def init_params(key, cfg):
    C = cfg["n_embed"]
    V = cfg["vocab_size"]
    S = cfg["block_size"]
    d_inner = cfg["expand"] * C
    d_state, d_conv = cfg["d_state"], cfg["d_conv"]
    dt_rank = -(-C // 16)          # Mamba default: ceil(d_model / 16)
    n_layers = cfg["n_layers"]
    keys = jax.random.split(key, 4 + n_layers)

    def nrm(k, shape, scale=0.02):
        return scale * jax.random.normal(k, shape, jnp.float32)

    params = {
        "tok_emb": nrm(keys[0], (V, C), 1.0),
        "pos_emb": nrm(keys[1], (S, C), 1.0),
        "lm_w": nrm(keys[2], (C, V)),
        "lm_b": jnp.zeros((1, V), jnp.float32),
        "blocks": [],
    }
    A0 = jnp.broadcast_to(jnp.arange(1, d_state + 1, dtype=jnp.float32)[:, None],
                          (d_state, d_inner))
    for li in range(n_layers):
        ks = jax.random.split(keys[4 + li], 10)
        params["blocks"].append({
            "ln1_g": jnp.ones((1, C), jnp.float32),
            "ln1_b": jnp.zeros((1, C), jnp.float32),
            "in_w": nrm(ks[0], (C, 2 * d_inner)),                       # [x | z]
            "conv_w": nrm(ks[1], (d_conv, d_inner), 0.1),
            "conv_b": nrm(ks[2], (1, d_inner), 0.1),
            "xproj_w": nrm(ks[3], (d_inner, dt_rank + 2 * d_state), 0.1),  # [dt|B|C]
            "dtp_w": nrm(ks[4], (dt_rank, d_inner), 0.1),
            "dtp_b": nrm(ks[5], (1, d_inner), 0.1),
            "A_log": jnp.log(A0),                     # (d_state, d_inner), S4D-real
            "D": jnp.ones((1, d_inner), jnp.float32),
            "out_w": nrm(ks[6], (d_inner, C)),
            "ln2_g": jnp.ones((1, C), jnp.float32),
            "ln2_b": jnp.zeros((1, C), jnp.float32),
            "w1": nrm(ks[7], (C, 4 * C)),
            "b1": jnp.zeros((1, 4 * C), jnp.float32),
            "w2": nrm(ks[8], (4 * C, C)),
            "b2": jnp.zeros((1, C), jnp.float32),
        })
    dims = dict(d_inner=d_inner, d_state=d_state, d_conv=d_conv, dt_rank=dt_rank)
    return params, dims


def mamba_audio_forward(params, dims, idx):
    B, T = idx.shape
    # Token / position embedding gather stays as cheap XLA glue.
    tok = jnp.take(params["tok_emb"], idx, axis=0)            # (B, T, C)
    pos = params["pos_emb"][:T]                               # (T, C)
    C = tok.shape[-1]
    x = (tok + pos[None, :, :]).astype(jnp.float32).reshape(B * T, C)
    for blk in params["blocks"]:
        x = fused_block(x, blk, dims, B, T)   # x + Mamba(LN1(x)), then + FFN(LN2(.))
    logits = lm_head(x, params["lm_w"], params["lm_b"]).reshape(B, T, -1)
    # TODO(synk): targets / F.cross_entropy loss path not implemented (targets=None).
    return logits, None


# ------------------------------------------------------------------- main ----
if __name__ == "__main__":
    cfg = dict(vocab_size=64, block_size=16, n_embed=32, n_heads=4, n_layers=2,
               d_state=4, d_conv=4, expand=2, dropout=0.0)
    key = jax.random.PRNGKey(0)
    pkey, ikey = jax.random.split(key)
    params, dims = init_params(pkey, cfg)

    B, T = 2, 8
    idx = jax.random.randint(ikey, (B, T), 0, cfg["vocab_size"], dtype=jnp.int32)

    fwd = jax.jit(lambda p, i: mamba_audio_forward(p, dims, i))
    logits, loss = fwd(params, idx)
    logits = jax.block_until_ready(logits)
    assert logits.shape == (B, T, cfg["vocab_size"])
    assert loss is None
    assert bool(jnp.all(jnp.isfinite(logits)))
    print("KERNEL_OK")
</pallas_src>

<mosaic_0001>
module attributes {stable_mosaic.version = 11 : i64} {
  func.func @lm_head_kernel(%arg0: i32, %arg1: i32, %arg2: memref<16x32xf32, #tpu.memory_space<vmem>>, %arg3: memref<32x64xbf16, #tpu.memory_space<vmem>>, %arg4: memref<1x64xf32, #tpu.memory_space<vmem>>, %arg5: memref<16x64xf32, #tpu.memory_space<vmem>>) attributes {dimension_semantics = [#tpu.dimension_semantics<parallel>, #tpu.dimension_semantics<parallel>], iteration_bounds = array<i64: 1, 1>, scalar_prefetch = 0 : i64, scratch_operands = 0 : i64, tpu.core_type = #tpu.core_type<tc>, window_params = [{transform_indices = @transform_0, window_bounds = array<i64: 16, 32>}, {transform_indices = @transform_1, window_bounds = array<i64: 32, 64>}, {transform_indices = @transform_2, window_bounds = array<i64: 1, 64>}, {transform_indices = @transform_3, window_bounds = array<i64: 16, 64>}]} {
    %c0 = arith.constant 0 : index
    %c0_0 = arith.constant 0 : index
    %0 = vector.load %arg2[%c0, %c0_0] : memref<16x32xf32, #tpu.memory_space<vmem>>, vector<16x32xf32>
    %c0_1 = arith.constant 0 : index
    %c0_2 = arith.constant 0 : index
    %1 = vector.load %arg3[%c0_1, %c0_2] : memref<32x64xbf16, #tpu.memory_space<vmem>>, vector<32x64xbf16>
    %2 = arith.truncf %0 : vector<16x32xf32> to vector<16x32xbf16>
    %cst = arith.constant dense<0.000000e+00> : vector<16x64xf32>
    %3 = tpu.matmul %2, %1, %cst {dimension_numbers = #tpu.dot_dimension_numbers<[1], [0], [0], [1], [0, 0, 1, 1], [], []>} : vector<16x32xbf16>, vector<32x64xbf16>, vector<16x64xf32> -> vector<16x64xf32>
    %c0_3 = arith.constant 0 : index
    %c0_4 = arith.constant 0 : index
    %4 = vector.load %arg4[%c0_3, %c0_4] : memref<1x64xf32, #tpu.memory_space<vmem>>, vector<1x64xf32>
    %5 = vector.broadcast %4 : vector<1x64xf32> to vector<16x64xf32>
    %6 = arith.addf %3, %5 : vector<16x64xf32>
    %c0_5 = arith.constant 0 : index
    %c0_6 = arith.constant 0 : index
    %7 = vector.load %arg5[%c0_5, %c0_6] : memref<16x64xf32, #tpu.memory_space<vmem>>, vector<16x64xf32>
    tpu.vector_store %arg5[%c0_5, %c0_6], %6 {strides = array<i32>} : memref<16x64xf32, #tpu.memory_space<vmem>>, vector<16x64xf32>,
    return
  }
  func.func @transform_0(%arg0: i32, %arg1: i32) -> (i32, i32) {
    %c0_i32 = arith.constant 0 : i32
    %c0_i32_0 = arith.constant 0 : i32
    return %arg0, %c0_i32 : i32, i32
  }
  func.func @transform_1(%arg0: i32, %arg1: i32) -> (i32, i32) {
    %c0_i32 = arith.constant 0 : i32
    %c0_i32_0 = arith.constant 0 : i32
    return %c0_i32, %arg1 : i32, i32
  }
  func.func @transform_2(%arg0: i32, %arg1: i32) -> (i32, i32) {
    %c0_i32 = arith.constant 0 : i32
    %c0_i32_0 = arith.constant 0 : i32
    return %c0_i32, %arg1 : i32, i32
  }
  func.func @transform_3(%arg0: i32, %arg1: i32) -> (i32, i32) {
    %c0_i32 = arith.constant 0 : i32
    return %arg0, %arg1 : i32, i32
  }
}

module attributes {stable_mosaic.version = 11 : i64} {
  func.func @fused_block_kernel(%arg0: memref<16x32xf32, #tpu.memory_space<vmem>>, %arg1: memref<1x480xf32, #tpu.memory_space<vmem>>, %arg2: memref<32x128xbf16, #tpu.memory_space<vmem>>, %arg3: memref<4x64xf32, #tpu.memory_space<vmem>>, %arg4: memref<64x10xf32, #tpu.memory_space<vmem>>, %arg5: memref<2x64xf32, #tpu.memory_space<vmem>>, %arg6: memref<4x64xf32, #tpu.memory_space<vmem>>, %arg7: memref<64x32xbf16, #tpu.memory_space<vmem>>, %arg8: memref<32x128xbf16, #tpu.memory_space<vmem>>, %arg9: memref<128x32xbf16, #tpu.memory_space<vmem>>, %arg10: memref<16x32xf32, #tpu.memory_space<vmem>>, %arg11: memref<16x256xf32, #tpu.memory_space<vmem>>, %arg12: memref<16x256xf32, #tpu.memory_space<vmem>>, %arg13: memref<16x4xf32, #tpu.memory_space<vmem>>, %arg14: memref<16x64xf32, #tpu.memory_space<vmem>>) attributes {dimension_semantics = [], scalar_prefetch = 0 : i64, scratch_operands = 4 : i64, tpu.core_type = #tpu.core_type<tc>} {
    %c0 = arith.constant 0 : index
    %c0_0 = arith.constant 0 : index
    %0 = vector.load %arg0[%c0, %c0_0] : memref<16x32xf32, #tpu.memory_space<vmem>>, vector<16x32xf32>
    %c0_1 = arith.constant 0 : index
    %c0_2 = arith.constant 0 : index
    %1 = vector.load %arg1[%c0_1, %c0_2] : memref<1x480xf32, #tpu.memory_space<vmem>>, vector<1x32xf32>
    %c0_3 = arith.constant 0 : index
    %c32 = arith.constant 32 : index
    %2 = vector.load %arg1[%c0_3, %c32] : memref<1x480xf32, #tpu.memory_space<vmem>>, vector<1x32xf32>
    %cst = arith.constant dense<0.000000e+00> : vector<16xf32>
    %3 = vector.multi_reduction <add>, %0, %cst [1] : vector<16x32xf32> to vector<16xf32>
    %4 = vector.shape_cast %3 : vector<16xf32> to vector<16x1xf32>
    %cst_4 = arith.constant 3.200000e+01 : f32
    %5 = vector.broadcast %cst_4 : f32 to vector<16x1xf32>
    %6 = arith.divf %4, %5 : vector<16x1xf32>
    %7 = vector.broadcast %6 : vector<16x1xf32> to vector<16x32xf32>
    %8 = arith.subf %0, %7 : vector<16x32xf32>
    %9 = arith.mulf %8, %8 : vector<16x32xf32>
    %cst_5 = arith.constant dense<0.000000e+00> : vector<16xf32>
    %10 = vector.multi_reduction <add>, %9, %cst_5 [1] : vector<16x32xf32> to vector<16xf32>
    %11 = vector.shape_cast %10 : vector<16xf32> to vector<16x1xf32>
    %cst_6 = arith.constant 3.200000e+01 : f32
    %12 = vector.broadcast %cst_6 : f32 to vector<16x1xf32>
    %13 = arith.divf %11, %12 : vector<16x1xf32>
    %14 = vector.broadcast %6 : vector<16x1xf32> to vector<16x32xf32>
    %15 = arith.subf %0, %14 : vector<16x32xf32>
    %cst_7 = arith.constant 9.99999974E-6 : f32
    %16 = vector.broadcast %cst_7 : f32 to vector<16x1xf32>
    %17 = arith.addf %13, %16 : vector<16x1xf32>
    %18 = math.rsqrt %17 : vector<16x1xf32>
    %19 = vector.broadcast %18 : vector<16x1xf32> to vector<16x32xf32>
    %20 = arith.mulf %15, %19 : vector<16x32xf32>
    %21 = vector.broadcast %1 : vector<1x32xf32> to vector<16x32xf32>
    %22 = arith.mulf %20, %21 : vector<16x32xf32>
    %23 = vector.broadcast %2 : vector<1x32xf32> to vector<16x32xf32>
    %24 = arith.addf %22, %23 : vector<16x32xf32>
    %c0_8 = arith.constant 0 : index
    %c0_9 = arith.constant 0 : index
    %25 = vector.load %arg2[%c0_8, %c0_9] : memref<32x128xbf16, #tpu.memory_space<vmem>>, vector<32x128xbf16>
    %26 = arith.truncf %24 : vector<16x32xf32> to vector<16x32xbf16>
    %cst_10 = arith.constant dense<0.000000e+00> : vector<16x128xf32>
    %27 = tpu.matmul %26, %25, %cst_10 {dimension_numbers = #tpu.dot_dimension_numbers<[1], [0], [0], [1], [0, 0, 1, 1], [], []>} : vector<16x32xbf16>, vector<32x128xbf16>, vector<16x128xf32> -> vector<16x128xf32>
    %28 = vector.extract_strided_slice %27 {offsets = [0, 0], sizes = [16, 64], strides = [1, 1]} : vector<16x128xf32> to vector<16x64xf32>
    %29 = vector.extract_strided_slice %27 {offsets = [0, 64], sizes = [16, 64], strides = [1, 1]} : vector<16x128xf32> to vector<16x64xf32>
    %30 = tpu.iota {dimensions = array<i32: 0>} : vector<16x64xi32>
    %c8_i32 = arith.constant 8 : i32
    %c0_i32 = arith.constant 0 : i32
    %31 = arith.cmpi eq, %c8_i32, %c0_i32 : i32
    %c1_i32 = arith.constant 1 : i32
    %32 = arith.select %31, %c1_i32, %c8_i32 : i32
    %33 = vector.broadcast %32 : i32 to vector<16x64xi32>
    %34 = arith.remsi %30, %33 : vector<16x64xi32>
    %c0_i32_11 = arith.constant 0 : i32
    %35 = vector.broadcast %c0_i32_11 : i32 to vector<16x64xi32>
    %36 = arith.cmpi ne, %34, %35 : vector<16x64xi32>
    %c0_i32_12 = arith.constant 0 : i32
    %37 = vector.broadcast %c0_i32_12 : i32 to vector<16x64xi32>
    %38 = arith.cmpi slt, %34, %37 : vector<16x64xi32>
    %c0_i32_13 = arith.constant 0 : i32
    %39 = arith.cmpi slt, %32, %c0_i32_13 : i32
    %40 = vector.broadcast %39 : i1 to vector<16x64xi1>
    %41 = vector.broadcast %40 : vector<16x64xi1> to vector<16x64xi1>
    %42 = arith.xori %38, %41 : vector<16x64xi1>
    %43 = arith.andi %42, %36 : vector<16x64xi1>
    %44 = vector.broadcast %32 : i32 to vector<16x64xi32>
    %45 = arith.addi %34, %44 : vector<16x64xi32>
    %46 = arith.select %43, %45, %34 : vector<16x64xi1>, vector<16x64xi32>
    %cst_14 = arith.constant 0.000000e+00 : f32
    %47 = vector.broadcast %cst_14 : f32 to vector<3x64xf32>
    %48 = tpu.concatenate %47, %28 in 0 : vector<3x64xf32>, vector<16x64xf32> -> vector<19x64xf32>
    %c0_15 = arith.constant 0 : index
    %c0_16 = arith.constant 0 : index
    %49 = vector.load %arg3[%c0_15, %c0_16] : memref<4x64xf32, #tpu.memory_space<vmem>>, vector<4x64xf32>
    %cst_17 = arith.constant 0.000000e+00 : f32
    %50 = vector.broadcast %cst_17 : f32 to vector<16x64xf32>
    %c0_18 = arith.constant 0 : index
    %c64 = arith.constant 64 : index
    %51 = vector.load %arg1[%c0_18, %c64] : memref<1x480xf32, #tpu.memory_space<vmem>>, vector<1x64xf32>
    %52 = vector.broadcast %51 : vector<1x64xf32> to vector<16x64xf32>
    %53 = arith.addf %50, %52 : vector<16x64xf32>
    %54 = vector.extract_strided_slice %48 {offsets = [0, 0], sizes = [16, 64], strides = [1, 1]} : vector<19x64xf32> to vector<16x64xf32>
    %c3_i32 = arith.constant 3 : i32
    %55 = vector.broadcast %c3_i32 : i32 to vector<16x64xi32>
    %56 = arith.cmpi sge, %46, %55 : vector<16x64xi32>
    %cst_19 = arith.constant 0.000000e+00 : f32
    %57 = vector.broadcast %cst_19 : f32 to vector<16x64xf32>
    %58 = arith.select %56, %54, %57 : vector<16x64xi1>, vector<16x64xf32>
    %59 = vector.extract_strided_slice %49 {offsets = [0, 0], sizes = [1, 64], strides = [1, 1]} : vector<4x64xf32> to vector<1x64xf32>
    %60 = vector.broadcast %59 : vector<1x64xf32> to vector<16x64xf32>
    %61 = arith.mulf %58, %60 : vector<16x64xf32>
    %62 = arith.addf %53, %61 : vector<16x64xf32>
    %63 = vector.extract_strided_slice %48 {offsets = [1, 0], sizes = [16, 64], strides = [1, 1]} : vector<19x64xf32> to vector<16x64xf32>
    %c2_i32 = arith.constant 2 : i32
    %64 = vector.broadcast %c2_i32 : i32 to vector<16x64xi32>
    %65 = arith.cmpi sge, %46, %64 : vector<16x64xi32>
    %cst_20 = arith.constant 0.000000e+00 : f32
    %66 = vector.broadcast %cst_20 : f32 to vector<16x64xf32>
    %67 = arith.select %65, %63, %66 : vector<16x64xi1>, vector<16x64xf32>
    %68 = vector.extract_strided_slice %49 {offsets = [1, 0], sizes = [1, 64], strides = [1, 1]} : vector<4x64xf32> to vector<1x64xf32>
    %69 = vector.broadcast %68 : vector<1x64xf32> to vector<16x64xf32>
    %70 = arith.mulf %67, %69 : vector<16x64xf32>
    %71 = arith.addf %62, %70 : vector<16x64xf32>
    %72 = vector.extract_strided_slice %48 {offsets = [2, 0], sizes = [16, 64], strides = [1, 1]} : vector<19x64xf32> to vector<16x64xf32>
    %c1_i32_21 = arith.constant 1 : i32
    %73 = vector.broadcast %c1_i32_21 : i32 to vector<16x64xi32>
    %74 = arith.cmpi sge, %46, %73 : vector<16x64xi32>
    %cst_22 = arith.constant 0.000000e+00 : f32
    %75 = vector.broadcast %cst_22 : f32 to vector<16x64xf32>
    %76 = arith.select %74, %72, %75 : vector<16x64xi1>, vector<16x64xf32>
    %77 = vector.extract_strided_slice %49 {offsets = [2, 0], sizes = [1, 64], strides = [1, 1]} : vector<4x64xf32> to vector<1x64xf32>
    %78 = vector.broadcast %77 : vector<1x64xf32> to vector<16x64xf32>
    %79 = arith.mulf %76, %78 : vector<16x64xf32>
    %80 = arith.addf %71, %79 : vector<16x64xf32>
    %81 = vector.extract_strided_slice %48 {offsets = [3, 0], sizes = [16, 64], strides = [1, 1]} : vector<19x64xf32> to vector<16x64xf32>
    %82 = vector.extract_strided_slice %49 {offsets = [3, 0], sizes = [1, 64], strides = [1, 1]} : vector<4x64xf32> to vector<1x64xf32>
    %83 = vector.broadcast %82 : vector<1x64xf32> to vector<16x64xf32>
    %84 = arith.mulf %81, %83 : vector<16x64xf32>
    %85 = arith.addf %80, %84 : vector<16x64xf32>
    %86 = math.absf %85 : vector<16x64xf32>
    %cst_23 = arith.constant 0.000000e+00 : f32
    %87 = vector.broadcast %cst_23 : f32 to vector<16x64xf32>
    %88 = arith.subf %87, %86 : vector<16x64xf32>
    %89 = math.exp %88 : vector<16x64xf32>
    %cst_24 = arith.constant 1.000000e+00 : f32
    %90 = vector.broadcast %cst_24 : f32 to vector<16x64xf32>
    %91 = arith.addf %90, %89 : vector<16x64xf32>
    %92 = tpu.reciprocal %91 {approx = true} : vector<16x64xf32> -> vector<16x64xf32>
    %cst_25 = arith.constant 0.000000e+00 : f32
    %93 = vector.broadcast %cst_25 : f32 to vector<16x64xf32>
    %94 = arith.cmpf oge, %85, %93 : vector<16x64xf32>
    %95 = arith.mulf %89, %92 : vector<16x64xf32>
    %96 = arith.select %94, %92, %95 : vector<16x64xi1>, vector<16x64xf32>
    %97 = arith.mulf %85, %96 : vector<16x64xf32>
    %c0_26 = arith.constant 0 : index
    %c0_27 = arith.constant 0 : index
    %98 = vector.load %arg4[%c0_26, %c0_27] : memref<64x10xf32, #tpu.memory_space<vmem>>, vector<64x10xf32>
    %cst_28 = arith.constant dense<0.000000e+00> : vector<16x10xf32>
    %99 = tpu.matmul %97, %98, %cst_28 {dimension_numbers = #tpu.dot_dimension_numbers<[1], [0], [0], [1], [0, 0, 1, 1], [], []>} : vector<16x64xf32>, vector<64x10xf32>, vector<16x10xf32> -> vector<16x10xf32>
    %100 = vector.extract_strided_slice %99 {offsets = [0, 0], sizes = [16, 2], strides = [1, 1]} : vector<16x10xf32> to vector<16x2xf32>
    %101 = vector.extract_strided_slice %99 {offsets = [0, 2], sizes = [16, 4], strides = [1, 1]} : vector<16x10xf32> to vector<16x4xf32>
    %102 = vector.extract_strided_slice %99 {offsets = [0, 6], sizes = [16, 4], strides = [1, 1]} : vector<16x10xf32> to vector<16x4xf32>
    %c0_29 = arith.constant 0 : index
    %c0_30 = arith.constant 0 : index
    %103 = vector.load %arg5[%c0_29, %c0_30] : memref<2x64xf32, #tpu.memory_space<vmem>>, vector<2x64xf32>
    %cst_31 = arith.constant dense<0.000000e+00> : vector<16x64xf32>
    %104 = tpu.matmul %100, %103, %cst_31 {dimension_numbers = #tpu.dot_dimension_numbers<[1], [0], [0], [1], [0, 0, 1, 1], [], []>} : vector<16x2xf32>, vector<2x64xf32>, vector<16x64xf32> -> vector<16x64xf32>
    %c0_32 = arith.constant 0 : index
    %c128 = arith.constant 128 : index
    %105 = vector.load %arg1[%c0_32, %c128] : memref<1x480xf32, #tpu.memory_space<vmem>>, vector<1x64xf32>
    %106 = vector.broadcast %105 : vector<1x64xf32> to vector<16x64xf32>
    %107 = arith.addf %104, %106 : vector<16x64xf32>
    %cst_33 = arith.constant 0.000000e+00 : f32
    %108 = vector.broadcast %cst_33 : f32 to vector<16x64xf32>
    %109 = arith.maximumf %107, %108 : vector<16x64xf32>
    %110 = math.absf %107 : vector<16x64xf32>
    %cst_34 = arith.constant 0.000000e+00 : f32
    %111 = vector.broadcast %cst_34 : f32 to vector<16x64xf32>
    %112 = arith.subf %111, %110 : vector<16x64xf32>
    %113 = math.exp %112 : vector<16x64xf32>
    %cst_35 = arith.constant 1.000000e+00 : f32
    %114 = vector.broadcast %cst_35 : f32 to vector<16x64xf32>
    %115 = arith.addf %114, %113 : vector<16x64xf32>
    %116 = math.log %115 : vector<16x64xf32>
    %117 = arith.addf %109, %116 : vector<16x64xf32>
    %c0_36 = arith.constant 0 : index
    %c0_37 = arith.constant 0 : index
    %118 = vector.load %arg6[%c0_36, %c0_37] : memref<4x64xf32, #tpu.memory_space<vmem>>, vector<4x64xf32>
    %119 = arith.mulf %117, %97 : vector<16x64xf32>
    %120 = vector.extract_strided_slice %118 {offsets = [0, 0], sizes = [1, 64], strides = [1, 1]} : vector<4x64xf32> to vector<1x64xf32>
    %121 = vector.broadcast %120 : vector<1x64xf32> to vector<16x64xf32>
    %122 = arith.mulf %117, %121 : vector<16x64xf32>
    %123 = math.exp %122 : vector<16x64xf32>
    %124 = vector.extract_strided_slice %118 {offsets = [1, 0], sizes = [1, 64], strides = [1, 1]} : vector<4x64xf32> to vector<1x64xf32>
    %125 = vector.broadcast %124 : vector<1x64xf32> to vector<16x64xf32>
    %126 = arith.mulf %117, %125 : vector<16x64xf32>
    %127 = math.exp %126 : vector<16x64xf32>
    %128 = vector.extract_strided_slice %118 {offsets = [2, 0], sizes = [1, 64], strides = [1, 1]} : vector<4x64xf32> to vector<1x64xf32>
    %129 = vector.broadcast %128 : vector<1x64xf32> to vector<16x64xf32>
    %130 = arith.mulf %117, %129 : vector<16x64xf32>
    %131 = math.exp %130 : vector<16x64xf32>
    %132 = vector.extract_strided_slice %118 {offsets = [3, 0], sizes = [1, 64], strides = [1, 1]} : vector<4x64xf32> to vector<1x64xf32>
    %133 = vector.broadcast %132 : vector<1x64xf32> to vector<16x64xf32>
    %134 = arith.mulf %117, %133 : vector<16x64xf32>
    %135 = math.exp %134 : vector<16x64xf32>
    %136 = tpu.concatenate %123, %127, %131, %135 in 1 : vector<16x64xf32>, vector<16x64xf32>, vector<16x64xf32>, vector<16x64xf32> -> vector<16x256xf32>
    %c0_38 = arith.constant 0 : index
    %c0_39 = arith.constant 0 : index
    %137 = vector.load %arg11[%c0_38, %c0_39] : memref<16x256xf32, #tpu.memory_space<vmem>>, vector<16x256xf32>
    tpu.vector_store %arg11[%c0_38, %c0_39], %136 {strides = array<i32>} : memref<16x256xf32, #tpu.memory_space<vmem>>, vector<16x256xf32>,
    %138 = vector.extract_strided_slice %101 {offsets = [0, 0], sizes = [16, 1], strides = [1, 1]} : vector<16x4xf32> to vector<16x1xf32>
    %139 = vector.broadcast %138 : vector<16x1xf32> to vector<16x64xf32>
    %140 = arith.mulf %119, %139 : vector<16x64xf32>
    %141 = vector.extract_strided_slice %101 {offsets = [0, 1], sizes = [16, 1], strides = [1, 1]} : vector<16x4xf32> to vector<16x1xf32>
    %142 = vector.broadcast %141 : vector<16x1xf32> to vector<16x64xf32>
    %143 = arith.mulf %119, %142 : vector<16x64xf32>
    %144 = vector.extract_strided_slice %101 {offsets = [0, 2], sizes = [16, 1], strides = [1, 1]} : vector<16x4xf32> to vector<16x1xf32>
    %145 = vector.broadcast %144 : vector<16x1xf32> to vector<16x64xf32>
    %146 = arith.mulf %119, %145 : vector<16x64xf32>
    %147 = vector.extract_strided_slice %101 {offsets = [0, 3], sizes = [16, 1], strides = [1, 1]} : vector<16x4xf32> to vector<16x1xf32>
    %148 = vector.broadcast %147 : vector<16x1xf32> to vector<16x64xf32>
    %149 = arith.mulf %119, %148 : vector<16x64xf32>
    %150 = tpu.concatenate %140, %143, %146, %149 in 1 : vector<16x64xf32>, vector<16x64xf32>, vector<16x64xf32>, vector<16x64xf32> -> vector<16x256xf32>
    %c0_40 = arith.constant 0 : index
    %c0_41 = arith.constant 0 : index
    %151 = vector.load %arg12[%c0_40, %c0_41] : memref<16x256xf32, #tpu.memory_space<vmem>>, vector<16x256xf32>
    tpu.vector_store %arg12[%c0_40, %c0_41], %150 {strides = array<i32>} : memref<16x256xf32, #tpu.memory_space<vmem>>, vector<16x256xf32>,
    %c0_42 = arith.constant 0 : index
    %c0_43 = arith.constant 0 : index
    %152 = vector.load %arg13[%c0_42, %c0_43] : memref<16x4xf32, #tpu.memory_space<vmem>>, vector<16x4xf32>
    tpu.vector_store %arg13[%c0_42, %c0_43], %102 {strides = array<i32>} : memref<16x4xf32, #tpu.memory_space<vmem>>, vector<16x4xf32>,
    %cst_44 = arith.constant 0.000000e+00 : f32
    %153 = vector.broadcast %cst_44 : f32 to vector<1x256xf32>
    %c0_i32_45 = arith.constant 0 : i32
    %c8_i32_46 = arith.constant 8 : i32
    %154 = arith.muli %c0_i32_45, %c8_i32_46 : i32
    %c0_i32_47 = arith.constant 0 : i32
    %155 = arith.addi %c0_i32_47, %154 : i32
    %156 = tpu.assume_multiple %155, 8 : i32
    %157 = arith.index_cast %156 : i32 to index
    %c0_48 = arith.constant 0 : index
    %158 = vector.load %arg11[%157, %c0_48] : memref<16x256xf32, #tpu.memory_space<vmem>>, vector<8x256xf32>
    %159 = arith.index_cast %156 : i32 to index
    %c0_49 = arith.constant 0 : index
    %160 = vector.load %arg12[%159, %c0_49] : memref<16x256xf32, #tpu.memory_space<vmem>>, vector<8x256xf32>
    %161 = arith.index_cast %156 : i32 to index
    %c0_50 = arith.constant 0 : index
    %162 = vector.load %arg13[%161, %c0_50] : memref<16x4xf32, #tpu.memory_space<vmem>>, vector<8x4xf32>
    %163 = vector.extract_strided_slice %158 {offsets = [0, 0], sizes = [1, 256], strides = [1, 1]} : vector<8x256xf32> to vector<1x256xf32>
    %164 = arith.mulf %163, %153 : vector<1x256xf32>
    %165 = vector.extract_strided_slice %160 {offsets = [0, 0], sizes = [1, 256], strides = [1, 1]} : vector<8x256xf32> to vector<1x256xf32>
    %166 = arith.addf %164, %165 : vector<1x256xf32>
    %167 = vector.extract_strided_slice %158 {offsets = [1, 0], sizes = [1, 256], strides = [1, 1]} : vector<8x256xf32> to vector<1x256xf32>
    %168 = arith.mulf %167, %166 : vector<1x256xf32>
    %169 = vector.extract_strided_slice %160 {offsets = [1, 0], sizes = [1, 256], strides = [1, 1]} : vector<8x256xf32> to vector<1x256xf32>
    %170 = arith.addf %168, %169 : vector<1x256xf32>
    %171 = vector.extract_strided_slice %158 {offsets = [2, 0], sizes = [1, 256], strides = [1, 1]} : vector<8x256xf32> to vector<1x256xf32>
    %172 = arith.mulf %171, %170 : vector<1x256xf32>
    %173 = vector.extract_strided_slice %160 {offsets = [2, 0], sizes = [1, 256], strides = [1, 1]} : vector<8x256xf32> to vector<1x256xf32>
    %174 = arith.addf %172, %173 : vector<1x256xf32>
    %175 = vector.extract_strided_slice %158 {offsets = [3, 0], sizes = [1, 256], strides = [1, 1]} : vector<8x256xf32> to vector<1x256xf32>
    %176 = arith.mulf %175, %174 : vector<1x256xf32>
    %177 = vector.extract_strided_slice %160 {offsets = [3, 0], sizes = [1, 256], strides = [1, 1]} : vector<8x256xf32> to vector<1x256xf32>
    %178 = arith.addf %176, %177 : vector<1x256xf32>
    %179 = vector.extract_strided_slice %158 {offsets = [4, 0], sizes = [1, 256], strides = [1, 1]} : vector<8x256xf32> to vector<1x256xf32>
    %180 = arith.mulf %179, %178 : vector<1x256xf32>
    %181 = vector.extract_strided_slice %160 {offsets = [4, 0], sizes = [1, 256], strides = [1, 1]} : vector<8x256xf32> to vector<1x256xf32>
    %182 = arith.addf %180, %181 : vector<1x256xf32>
    %183 = vector.extract_strided_slice %158 {offsets = [5, 0], sizes = [1, 256], strides = [1, 1]} : vector<8x256xf32> to vector<1x256xf32>
    %184 = arith.mulf %183, %182 : vector<1x256xf32>
    %185 = vector.extract_strided_slice %160 {offsets = [5, 0], sizes = [1, 256], strides = [1, 1]} : vector<8x256xf32> to vector<1x256xf32>
    %186 = arith.addf %184, %185 : vector<1x256xf32>
    %187 = vector.extract_strided_slice %158 {offsets = [6, 0], sizes = [1, 256], strides = [1, 1]} : vector<8x256xf32> to vector<1x256xf32>
    %188 = arith.mulf %187, %186 : vector<1x256xf32>
    %189 = vector.extract_strided_slice %160 {offsets = [6, 0], sizes = [1, 256], strides = [1, 1]} : vector<8x256xf32> to vector<1x256xf32>
    %190 = arith.addf %188, %189 : vector<1x256xf32>
    %191 = vector.extract_strided_slice %158 {offsets = [7, 0], sizes = [1, 256], strides = [1, 1]} : vector<8x256xf32> to vector<1x256xf32>
    %192 = arith.mulf %191, %190 : vector<1x256xf32>
    %193 = vector.extract_strided_slice %160 {offsets = [7, 0], sizes = [1, 256], strides = [1, 1]} : vector<8x256xf32> to vector<1x256xf32>
    %194 = arith.addf %192, %193 : vector<1x256xf32>
    %195 = tpu.concatenate %166, %170, %174, %178, %182, %186, %190, %194 in 0 : vector<1x256xf32>, vector<1x256xf32>, vector<1x256xf32>, vector<1x256xf32>, vector<1x256xf32>, vector<1x256xf32>, vector<1x256xf32>, vector<1x256xf32> -> vector<8x256xf32>
    %cst_51 = arith.constant 0.000000e+00 : f32
    %196 = vector.broadcast %cst_51 : f32 to vector<8x64xf32>
    %197 = vector.extract_strided_slice %195 {offsets = [0, 0], sizes = [8, 64], strides = [1, 1]} : vector<8x256xf32> to vector<8x64xf32>
    %198 = vector.extract_strided_slice %162 {offsets = [0, 0], sizes = [8, 1], strides = [1, 1]} : vector<8x4xf32> to vector<8x1xf32>
    %199 = vector.broadcast %198 : vector<8x1xf32> to vector<8x64xf32>
    %200 = arith.mulf %197, %199 : vector<8x64xf32>
    %201 = arith.addf %196, %200 : vector<8x64xf32>
    %202 = vector.extract_strided_slice %195 {offsets = [0, 64], sizes = [8, 64], strides = [1, 1]} : vector<8x256xf32> to vector<8x64xf32>
    %203 = vector.extract_strided_slice %162 {offsets = [0, 1], sizes = [8, 1], strides = [1, 1]} : vector<8x4xf32> to vector<8x1xf32>
    %204 = vector.broadcast %203 : vector<8x1xf32> to vector<8x64xf32>
    %205 = arith.mulf %202, %204 : vector<8x64xf32>
    %206 = arith.addf %201, %205 : vector<8x64xf32>
    %207 = vector.extract_strided_slice %195 {offsets = [0, 128], sizes = [8, 64], strides = [1, 1]} : vector<8x256xf32> to vector<8x64xf32>
    %208 = vector.extract_strided_slice %162 {offsets = [0, 2], sizes = [8, 1], strides = [1, 1]} : vector<8x4xf32> to vector<8x1xf32>
    %209 = vector.broadcast %208 : vector<8x1xf32> to vector<8x64xf32>
    %210 = arith.mulf %207, %209 : vector<8x64xf32>
    %211 = arith.addf %206, %210 : vector<8x64xf32>
    %212 = vector.extract_strided_slice %195 {offsets = [0, 192], sizes = [8, 64], strides = [1, 1]} : vector<8x256xf32> to vector<8x64xf32>
    %213 = vector.extract_strided_slice %162 {offsets = [0, 3], sizes = [8, 1], strides = [1, 1]} : vector<8x4xf32> to vector<8x1xf32>
    %214 = vector.broadcast %213 : vector<8x1xf32> to vector<8x64xf32>
    %215 = arith.mulf %212, %214 : vector<8x64xf32>
    %216 = arith.addf %211, %215 : vector<8x64xf32>
    %217 = arith.index_cast %156 : i32 to index
    %c0_52 = arith.constant 0 : index
    %218 = vector.load %arg14[%217, %c0_52] : memref<16x64xf32, #tpu.memory_space<vmem>>, vector<8x64xf32>
    tpu.vector_store %arg14[%217, %c0_52], %216 {strides = array<i32>} : memref<16x64xf32, #tpu.memory_space<vmem>>, vector<8x64xf32>,
    %c1_i32_53 = arith.constant 1 : i32
    %cst_54 = arith.constant 0.000000e+00 : f32
    %219 = vector.broadcast %cst_54 : f32 to vector<1x256xf32>
    %c0_i32_55 = arith.constant 0 : i32
    %c8_i32_56 = arith.constant 8 : i32
    %220 = arith.muli %c0_i32_55, %c8_i32_56 : i32
    %c8_i32_57 = arith.constant 8 : i32
    %221 = arith.addi %c8_i32_57, %220 : i32
    %222 = tpu.assume_multiple %221, 8 : i32
    %223 = arith.index_cast %222 : i32 to index
    %c0_58 = arith.constant 0 : index
    %224 = vector.load %arg11[%223, %c0_58] : memref<16x256xf32, #tpu.memory_space<vmem>>, vector<8x256xf32>
    %225 = arith.index_cast %222 : i32 to index
    %c0_59 = arith.constant 0 : index
    %226 = vector.load %arg12[%225, %c0_59] : memref<16x256xf32, #tpu.memory_space<vmem>>, vector<8x256xf32>
    %227 = arith.index_cast %222 : i32 to index
    %c0_60 = arith.constant 0 : index
    %228 = vector.load %arg13[%227, %c0_60] : memref<16x4xf32, #tpu.memory_space<vmem>>, vector<8x4xf32>
    %229 = vector.extract_strided_slice %224 {offsets = [0, 0], sizes = [1, 256], strides = [1, 1]} : vector<8x256xf32> to vector<1x256xf32>
    %230 = arith.mulf %229, %219 : vector<1x256xf32>
    %231 = vector.extract_strided_slice %226 {offsets = [0, 0], sizes = [1, 256], strides = [1, 1]} : vector<8x256xf32> to vector<1x256xf32>
    %232 = arith.addf %230, %231 : vector<1x256xf32>
    %233 = vector.extract_strided_slice %224 {offsets = [1, 0], sizes = [1, 256], strides = [1, 1]} : vector<8x256xf32> to vector<1x256xf32>
    %234 = arith.mulf %233, %232 : vector<1x256xf32>
    %235 = vector.extract_strided_slice %226 {offsets = [1, 0], sizes = [1, 256], strides = [1, 1]} : vector<8x256xf32> to vector<1x256xf32>
    %236 = arith.addf %234, %235 : vector<1x256xf32>
    %237 = vector.extract_strided_slice %224 {offsets = [2, 0], sizes = [1, 256], strides = [1, 1]} : vector<8x256xf32> to vector<1x256xf32>
    %238 = arith.mulf %237, %236 : vector<1x256xf32>
    %239 = vector.extract_strided_slice %226 {offsets = [2, 0], sizes = [1, 256], strides = [1, 1]} : vector<8x256xf32> to vector<1x256xf32>
    %240 = arith.addf %238, %239 : vector<1x256xf32>
    %241 = vector.extract_strided_slice %224 {offsets = [3, 0], sizes = [1, 256], strides = [1, 1]} : vector<8x256xf32> to vector<1x256xf32>
    %242 = arith.mulf %241, %240 : vector<1x256xf32>
    %243 = vector.extract_strided_slice %226 {offsets = [3, 0], sizes = [1, 256], strides = [1, 1]} : vector<8x256xf32> to vector<1x256xf32>
    %244 = arith.addf %242, %243 : vector<1x256xf32>
    %245 = vector.extract_strided_slice %224 {offsets = [4, 0], sizes = [1, 256], strides = [1, 1]} : vector<8x256xf32> to vector<1x256xf32>
    %246 = arith.mulf %245, %244 : vector<1x256xf32>
    %247 = vector.extract_strided_slice %226 {offsets = [4, 0], sizes = [1, 256], strides = [1, 1]} : vector<8x256xf32> to vector<1x256xf32>
    %248 = arith.addf %246, %247 : vector<1x256xf32>
    %249 = vector.extract_strided_slice %224 {offsets = [5, 0], sizes = [1, 256], strides = [1, 1]} : vector<8x256xf32> to vector<1x256xf32>
    %250 = arith.mulf %249, %248 : vector<1x256xf32>
    %251 = vector.extract_strided_slice %226 {offsets = [5, 0], sizes = [1, 256], strides = [1, 1]} : vector<8x256xf32> to vector<1x256xf32>
    %252 = arith.addf %250, %251 : vector<1x256xf32>
    %253 = vector.extract_strided_slice %224 {offsets = [6, 0], sizes = [1, 256], strides = [1, 1]} : vector<8x256xf32> to vector<1x256xf32>
    %254 = arith.mulf %253, %252 : vector<1x256xf32>
    %255 = vector.extract_strided_slice %226 {offsets = [6, 0], sizes = [1, 256], strides = [1, 1]} : vector<8x256xf32> to vector<1x256xf32>
    %256 = arith.addf %254, %255 : vector<1x256xf32>
    %257 = vector.extract_strided_slice %224 {offsets = [7, 0], sizes = [1, 256], strides = [1, 1]} : vector<8x256xf32> to vector<1x256xf32>
    %258 = arith.mulf %257, %256 : vector<1x256xf32>
    %259 = vector.extract_strided_slice %226 {offsets = [7, 0], sizes = [1, 256], strides = [1, 1]} : vector<8x256xf32> to vector<1x256xf32>
    %260 = arith.addf %258, %259 : vector<1x256xf32>
    %261 = tpu.concatenate %232, %236, %240, %244, %248, %252, %256, %260 in 0 : vector<1x256xf32>, vector<1x256xf32>, vector<1x256xf32>, vector<1x256xf32>, vector<1x256xf32>, vector<1x256xf32>, vector<1x256xf32>, vector<1x256xf32> -> vector<8x256xf32>
    %cst_61 = arith.constant 0.000000e+00 : f32
    %262 = vector.broadcast %cst_61 : f32 to vector<8x64xf32>
    %263 = vector.extract_strided_slice %261 {offsets = [0, 0], sizes = [8, 64], strides = [1, 1]} : vector<8x256xf32> to vector<8x64xf32>
    %264 = vector.extract_strided_slice %228 {offsets = [0, 0], sizes = [8, 1], strides = [1, 1]} : vector<8x4xf32> to vector<8x1xf32>
    %265 = vector.broadcast %264 : vector<8x1xf32> to vector<8x64xf32>
    %266 = arith.mulf %263, %265 : vector<8x64xf32>
    %267 = arith.addf %262, %266 : vector<8x64xf32>
    %268 = vector.extract_strided_slice %261 {offsets = [0, 64], sizes = [8, 64], strides = [1, 1]} : vector<8x256xf32> to vector<8x64xf32>
    %269 = vector.extract_strided_slice %228 {offsets = [0, 1], sizes = [8, 1], strides = [1, 1]} : vector<8x4xf32> to vector<8x1xf32>
    %270 = vector.broadcast %269 : vector<8x1xf32> to vector<8x64xf32>
    %271 = arith.mulf %268, %270 : vector<8x64xf32>
    %272 = arith.addf %267, %271 : vector<8x64xf32>
    %273 = vector.extract_strided_slice %261 {offsets = [0, 128], sizes = [8, 64], strides = [1, 1]} : vector<8x256xf32> to vector<8x64xf32>
    %274 = vector.extract_strided_slice %228 {offsets = [0, 2], sizes = [8, 1], strides = [1, 1]} : vector<8x4xf32> to vector<8x1xf32>
    %275 = vector.broadcast %274 : vector<8x1xf32> to vector<8x64xf32>
    %276 = arith.mulf %273, %275 : vector<8x64xf32>
    %277 = arith.addf %272, %276 : vector<8x64xf32>
    %278 = vector.extract_strided_slice %261 {offsets = [0, 192], sizes = [8, 64], strides = [1, 1]} : vector<8x256xf32> to vector<8x64xf32>
    %279 = vector.extract_strided_slice %228 {offsets = [0, 3], sizes = [8, 1], strides = [1, 1]} : vector<8x4xf32> to vector<8x1xf32>
    %280 = vector.broadcast %279 : vector<8x1xf32> to vector<8x64xf32>
    %281 = arith.mulf %278, %280 : vector<8x64xf32>
    %282 = arith.addf %277, %281 : vector<8x64xf32>
    %283 = arith.index_cast %222 : i32 to index
    %c0_62 = arith.constant 0 : index
    %284 = vector.load %arg14[%283, %c0_62] : memref<16x64xf32, #tpu.memory_space<vmem>>, vector<8x64xf32>
    tpu.vector_store %arg14[%283, %c0_62], %282 {strides = array<i32>} : memref<16x64xf32, #tpu.memory_space<vmem>>, vector<8x64xf32>,
    %c1_i32_63 = arith.constant 1 : i32
    %c0_64 = arith.constant 0 : index
    %c0_65 = arith.constant 0 : index
    %285 = vector.load %arg14[%c0_64, %c0_65] : memref<16x64xf32, #tpu.memory_space<vmem>>, vector<16x64xf32>
    %c0_66 = arith.constant 0 : index
    %c192 = arith.constant 192 : index
    %286 = vector.load %arg1[%c0_66, %c192] : memref<1x480xf32, #tpu.memory_space<vmem>>, vector<1x64xf32>
    %287 = vector.broadcast %286 : vector<1x64xf32> to vector<16x64xf32>
    %288 = arith.mulf %97, %287 : vector<16x64xf32>
    %289 = arith.addf %285, %288 : vector<16x64xf32>
    %290 = math.absf %29 : vector<16x64xf32>
    %cst_67 = arith.constant 0.000000e+00 : f32
    %291 = vector.broadcast %cst_67 : f32 to vector<16x64xf32>
    %292 = arith.subf %291, %290 : vector<16x64xf32>
    %293 = math.exp %292 : vector<16x64xf32>
    %cst_68 = arith.constant 1.000000e+00 : f32
    %294 = vector.broadcast %cst_68 : f32 to vector<16x64xf32>
    %295 = arith.addf %294, %293 : vector<16x64xf32>
    %296 = tpu.reciprocal %295 {approx = true} : vector<16x64xf32> -> vector<16x64xf32>
    %cst_69 = arith.constant 0.000000e+00 : f32
    %297 = vector.broadcast %cst_69 : f32 to vector<16x64xf32>
    %298 = arith.cmpf oge, %29, %297 : vector<16x64xf32>
    %299 = arith.mulf %293, %296 : vector<16x64xf32>
    %300 = arith.select %298, %296, %299 : vector<16x64xi1>, vector<16x64xf32>
    %301 = arith.mulf %29, %300 : vector<16x64xf32>
    %302 = arith.mulf %289, %301 : vector<16x64xf32>
    %c0_70 = arith.constant 0 : index
    %c0_71 = arith.constant 0 : index
    %303 = vector.load %arg7[%c0_70, %c0_71] : memref<64x32xbf16, #tpu.memory_space<vmem>>, vector<64x32xbf16>
    %304 = arith.truncf %302 : vector<16x64xf32> to vector<16x64xbf16>
    %cst_72 = arith.constant dense<0.000000e+00> : vector<16x32xf32>
    %305 = tpu.matmul %304, %303, %cst_72 {dimension_numbers = #tpu.dot_dimension_numbers<[1], [0], [0], [1], [0, 0, 1, 1], [], []>} : vector<16x64xbf16>, vector<64x32xbf16>, vector<16x32xf32> -> vector<16x32xf32>
    %306 = arith.addf %0, %305 : vector<16x32xf32>
    %c0_73 = arith.constant 0 : index
    %c256 = arith.constant 256 : index
    %307 = vector.load %arg1[%c0_73, %c256] : memref<1x480xf32, #tpu.memory_space<vmem>>, vector<1x32xf32>
    %c0_74 = arith.constant 0 : index
    %c288 = arith.constant 288 : index
    %308 = vector.load %arg1[%c0_74, %c288] : memref<1x480xf32, #tpu.memory_space<vmem>>, vector<1x32xf32>
    %cst_75 = arith.constant dense<0.000000e+00> : vector<16xf32>
    %309 = vector.multi_reduction <add>, %306, %cst_75 [1] : vector<16x32xf32> to vector<16xf32>
    %310 = vector.shape_cast %309 : vector<16xf32> to vector<16x1xf32>
    %cst_76 = arith.constant 3.200000e+01 : f32
    %311 = vector.broadcast %cst_76 : f32 to vector<16x1xf32>
    %312 = arith.divf %310, %311 : vector<16x1xf32>
    %313 = vector.broadcast %312 : vector<16x1xf32> to vector<16x32xf32>
    %314 = arith.subf %306, %313 : vector<16x32xf32>
    %315 = arith.mulf %314, %314 : vector<16x32xf32>
    %cst_77 = arith.constant dense<0.000000e+00> : vector<16xf32>
    %316 = vector.multi_reduction <add>, %315, %cst_77 [1] : vector<16x32xf32> to vector<16xf32>
    %317 = vector.shape_cast %316 : vector<16xf32> to vector<16x1xf32>
    %cst_78 = arith.constant 3.200000e+01 : f32
    %318 = vector.broadcast %cst_78 : f32 to vector<16x1xf32>
    %319 = arith.divf %317, %318 : vector<16x1xf32>
    %320 = vector.broadcast %312 : vector<16x1xf32> to vector<16x32xf32>
    %321 = arith.subf %306, %320 : vector<16x32xf32>
    %cst_79 = arith.constant 9.99999974E-6 : f32
    %322 = vector.broadcast %cst_79 : f32 to vector<16x1xf32>
    %323 = arith.addf %319, %322 : vector<16x1xf32>
    %324 = math.rsqrt %323 : vector<16x1xf32>
    %325 = vector.broadcast %324 : vector<16x1xf32> to vector<16x32xf32>
    %326 = arith.mulf %321, %325 : vector<16x32xf32>
    %327 = vector.broadcast %307 : vector<1x32xf32> to vector<16x32xf32>
    %328 = arith.mulf %326, %327 : vector<16x32xf32>
    %329 = vector.broadcast %308 : vector<1x32xf32> to vector<16x32xf32>
    %330 = arith.addf %328, %329 : vector<16x32xf32>
    %c0_80 = arith.constant 0 : index
    %c0_81 = arith.constant 0 : index
    %331 = vector.load %arg8[%c0_80, %c0_81] : memref<32x128xbf16, #tpu.memory_space<vmem>>, vector<32x128xbf16>
    %332 = arith.truncf %330 : vector<16x32xf32> to vector<16x32xbf16>
    %cst_82 = arith.constant dense<0.000000e+00> : vector<16x128xf32>
    %333 = tpu.matmul %332, %331, %cst_82 {dimension_numbers = #tpu.dot_dimension_numbers<[1], [0], [0], [1], [0, 0, 1, 1], [], []>} : vector<16x32xbf16>, vector<32x128xbf16>, vector<16x128xf32> -> vector<16x128xf32>
    %c0_83 = arith.constant 0 : index
    %c320 = arith.constant 320 : index
    %334 = vector.load %arg1[%c0_83, %c320] : memref<1x480xf32, #tpu.memory_space<vmem>>, vector<1x128xf32>
    %335 = vector.broadcast %334 : vector<1x128xf32> to vector<16x128xf32>
    %336 = arith.addf %333, %335 : vector<16x128xf32>
    %cst_84 = arith.constant 0.000000e+00 : f32
    %337 = vector.broadcast %cst_84 : f32 to vector<16x128xf32>
    %338 = arith.maximumf %336, %337 : vector<16x128xf32>
    %c0_85 = arith.constant 0 : index
    %c0_86 = arith.constant 0 : index
    %339 = vector.load %arg9[%c0_85, %c0_86] : memref<128x32xbf16, #tpu.memory_space<vmem>>, vector<128x32xbf16>
    %340 = arith.truncf %338 : vector<16x128xf32> to vector<16x128xbf16>
    %cst_87 = arith.constant dense<0.000000e+00> : vector<16x32xf32>
    %341 = tpu.matmul %340, %339, %cst_87 {dimension_numbers = #tpu.dot_dimension_numbers<[1], [0], [0], [1], [0, 0, 1, 1], [], []>} : vector<16x128xbf16>, vector<128x32xbf16>, vector<16x32xf32> -> vector<16x32xf32>
    %342 = arith.addf %306, %341 : vector<16x32xf32>
    %c0_88 = arith.constant 0 : index
    %c448 = arith.constant 448 : index
    %343 = vector.load %arg1[%c0_88, %c448] : memref<1x480xf32, #tpu.memory_space<vmem>>, vector<1x32xf32>
    %344 = vector.broadcast %343 : vector<1x32xf32> to vector<16x32xf32>
    %345 = arith.addf %342, %344 : vector<16x32xf32>
    %c0_89 = arith.constant 0 : index
    %c0_90 = arith.constant 0 : index
    %346 = vector.load %arg10[%c0_89, %c0_90] : memref<16x32xf32, #tpu.memory_space<vmem>>, vector<16x32xf32>
    tpu.vector_store %arg10[%c0_89, %c0_90], %345 {strides = array<i32>} : memref<16x32xf32, #tpu.memory_space<vmem>>, vector<16x32xf32>,
    return
  }
}

</mosaic_0001>

<llo_original>
// kernel: _lambda_.5
$region0: #{_lambda_.5}
  #allocation0 [shape = 'u32[]', space=smem, size = 0x4, offset = 0x4, fixed_abs, tag = 'smem constant byte address 0x4 - core index']
  #allocation1 [shape = 'u32[72,128]{1,0:T(1,128)}', space=vmem, size = 0x9000, scoped, tag = 'internal scratch']
  %s0 = inlined_call_operand.vmem [shape: f32[16,32], index: 0, kind: input, shape index: {}]
  %s1 = inlined_call_operand.vmem [shape: bf16[32,64], index: 1, kind: input, shape index: {}]
  %s2 = inlined_call_operand.vmem [shape: f32[1,64], index: 2, kind: input, shape index: {}]
  %s3 = inlined_call_operand.hbm [shape: f32[16,64], index: 3, kind: output, shape index: {}]
  %s4 = sld [smem:[#allocation0]]
  $region22: #{_lambda_.5} parent=0
    _
  %s6 = ssub.s32 1, %s4
  %s7 = scalar_select 0, %s6, %s4
  $region1: #{_lambda_.5} parent=0
    #allocation2 [shape = 'u8[8192]{0}', space=vmem, size = 0x2000, scoped, tag = 'output window, operand 0, single buffered']
    #allocation3 [shape = 's32[1]{0}', space=sflag, size = 0x4, scoped, tag = 'scoped memory for _lambda_.5']
    %8 = vsyncpa [#allocation3], 0
    // Predicated region
    $region2: #{_lambda_.5} parent=1 // pred_check
      _
    $region3: #{_lambda_.5} parent=1 // pred_check_branch
      %10 = sbr.rel (0) target = $region5
    $region4: #{_lambda_.5} parent=1 // pred_region
      _
    $region5: #{_lambda_.5} parent=1 // pred_fallthru
      _
    // Predicated region
    $region6: #{_lambda_.5} parent=1 // pred_check
      _
    $region7: #{_lambda_.5} parent=1 // pred_check_branch
      %12 = sbr.rel (0) target = $region9
    $region8: #{_lambda_.5} parent=1 // pred_region
      _
    $region9: #{_lambda_.5} parent=1 // pred_fallthru
      _
    // Predicated region
    $region10: #{_lambda_.5} parent=1 // pred_check
      _
    $region11: #{_lambda_.5} parent=1 // pred_check_branch
      %14 = sbr.rel (0) target = $region13
    $region12: #{_lambda_.5} parent=1 // pred_region
      _
    $region13: #{_lambda_.5} parent=1 // pred_fallthru
      _
    %v16 = vld [vmem:[%s0] sm:$0xff]
    %v17 = vld [vmem:[%s0 + $0x8] sm:$0xff]
    %v18 = vld [vmem:[%s1] sm:$0xf]
    %v19 = vld [vmem:[%s1 + $0x4] sm:$0xf]
    %v20 = vld [vmem:[%s1 + $0x8] sm:$0xf]
    %v21 = vld [vmem:[%s1 + $0xc] sm:$0xf]
    %v22 = vpack.c.bf16 %v17, %v16
    %v23 = vld [vmem:[%s2] sm:$0x1]
    %v25 = vperm.slane %v23, 0
    %v31 = vunpack.c.l.b16 %v18
    %v32 = vunpack.c.l.b16 %v19
    %v33 = vunpack.c.l.b16 %v20
    %v34 = vunpack.c.l.b16 %v21
    %v35 = vpack.c.b16 %v32, %v31
    %v36 = vpack.c.b16 %v34, %v33
    %vm39 = vcmask 261120
    %v41 = vsel %vm39, %v22, 0
    %43 = vmatpush.bf16.msra.mxu0 0
    %44 = vmatpush.bf16.msra.mxu0 0
    %45 = vmatpush.bf16.msra.mxu0 0
    %46 = vmatpush.bf16.msra.mxu0 0
    %47 = vmatpush.bf16.msra.mxu0 0
    %48 = vmatpush.bf16.msra.mxu0 0
    %49 = vmatpush.bf16.msra.mxu0 %v36
    %50 = vmatpush.bf16.msra.mxu0 %v35
    %51 = vmatmul.bf16.gmra.mxu0 %v41
    %v52 = vpop.f32.mrf.mxu0
    %v53 = vadd.f32 %v25, %v52
    %v54 = vpop.f32.mrf.mxu0
    %v55 = vadd.f32 %v25, %v54
    %56 = vdwg.mxu0
    %vm57 = vcmask 523264
    %58 = vst.msk [vmem:[#allocation2] sm:$0xff] %vm57, %v53
    %59 = vst.msk [vmem:[#allocation2 + $0x8] sm:$0xff] %vm57, %v55
    // Predicated region
    $region14: #{_lambda_.5} parent=1 // pred_check
      _
    $region15: #{_lambda_.5} parent=1 // pred_check_branch
      %61 = sbr.rel (0) target = $region17
    $region16: #{_lambda_.5} parent=1 // pred_region
      %63 = vsyncadd [#allocation3], 0
      %s64 = sshll.u32 [#allocation2], 4
      %s65 = int_to_ptr.vmem [resolvable:$true] %s64
      %s66 = sshll.u32 %s3, 4
      %s67 = int_to_ptr.hbm [resolvable:$true] %s66
      %72 = dma.vmem_to_hbm [thread:$0]  %s65, 256, %s67, [#allocation3], 128, 128, 8
    $region17: #{_lambda_.5} parent=1 // pred_fallthru
      _
    // Predicated region
    $region18: #{_lambda_.5} parent=1 // pred_check
      _
    $region19: #{_lambda_.5} parent=1 // pred_check_branch
      %74 = sbr.rel (0) target = $region21
    $region20: #{_lambda_.5} parent=1 // pred_region
      %76 = dma.done [#allocation3], 256
    $region21: #{_lambda_.5} parent=1 // pred_fallthru
      _
    %77 = vsyncpa [#allocation3], 1

// kernel: _lambda_.3
$region0: #{_lambda_.3}
  #allocation0 [shape = 'u32[]', space=smem, size = 0x4, offset = 0x4, fixed_abs, tag = 'smem constant byte address 0x4 - core index']
  #allocation1 [shape = 'u32[72,128]{1,0:T(1,128)}', space=vmem, size = 0x9000, scoped, tag = 'internal scratch']
  #allocation2 [shape = 'f32[16,256]{1,0:T(8,128)}', space=vmem, size = 0x4000, scoped, tag = 'scratch operand']
  #allocation3 [shape = 'f32[16,256]{1,0:T(8,128)}', space=vmem, size = 0x4000, scoped, tag = 'scratch operand']
  #allocation4 [shape = 'f32[16,4]{1,0:T(8,128)}', space=vmem, size = 0x2000, scoped, tag = 'scratch operand']
  #allocation5 [shape = 'f32[16,64]{1,0:T(8,128)}', space=vmem, size = 0x2000, scoped, tag = 'scratch operand']
  %s0 = inlined_call_operand.vmem [shape: f32[16,32], index: 0, kind: input, shape index: {}]
  %s1 = inlined_call_operand.vmem [shape: f32[1,480], index: 1, kind: input, shape index: {}]
  %s2 = inlined_call_operand.vmem [shape: bf16[32,128], index: 2, kind: input, shape index: {}]
  %s3 = inlined_call_operand.vmem [shape: f32[4,64], index: 3, kind: input, shape index: {}]
  %s4 = inlined_call_operand.vmem [shape: f32[64,10], index: 4, kind: input, shape index: {}]
  %s5 = inlined_call_operand.vmem [shape: f32[2,64], index: 5, kind: input, shape index: {}]
  %s6 = inlined_call_operand.vmem [shape: f32[4,64], index: 6, kind: input, shape index: {}]
  %s7 = inlined_call_operand.vmem [shape: bf16[64,32], index: 7, kind: input, shape index: {}]
  %s8 = inlined_call_operand.vmem [shape: bf16[32,128], index: 8, kind: input, shape index: {}]
  %s9 = inlined_call_operand.vmem [shape: bf16[128,32], index: 9, kind: input, shape index: {}]
  %s10 = inlined_call_operand.vmem [shape: f32[16,32], index: 10, kind: output, shape index: {}]
  %s11 = sld [smem:[#allocation0]]
  $region50: #{_lambda_.3} parent=0
    _
  %s13 = ssub.s32 1, %s11
  %s14 = scalar_select 0, %s13, %s11
  // Predicated region
  $region2: #{_lambda_.3} parent=0 // pred_check
    _
  $region3: #{_lambda_.3} parent=0 // pred_check_branch
    %16 = sbr.rel (0) target = $region5
  $region4: #{_lambda_.3} parent=0 // pred_region
    _
  $region5: #{_lambda_.3} parent=0 // pred_fallthru
    _
  // Predicated region
  $region6: #{_lambda_.3} parent=0 // pred_check
    _
  $region7: #{_lambda_.3} parent=0 // pred_check_branch
    %18 = sbr.rel (0) target = $region9
  $region8: #{_lambda_.3} parent=0 // pred_region
    _
  $region9: #{_lambda_.3} parent=0 // pred_fallthru
    _
  // Predicated region
  $region10: #{_lambda_.3} parent=0 // pred_check
    _
  $region11: #{_lambda_.3} parent=0 // pred_check_branch
    %20 = sbr.rel (0) target = $region13
  $region12: #{_lambda_.3} parent=0 // pred_region
    _
  $region13: #{_lambda_.3} parent=0 // pred_fallthru
    _
  // Predicated region
  $region14: #{_lambda_.3} parent=0 // pred_check
    _
  $region15: #{_lambda_.3} parent=0 // pred_check_branch
    %22 = sbr.rel (0) target = $region17
  $region16: #{_lambda_.3} parent=0 // pred_region
    _
  $region17: #{_lambda_.3} parent=0 // pred_fallthru
    _
  // Predicated region
  $region18: #{_lambda_.3} parent=0 // pred_check
    _
  $region19: #{_lambda_.3} parent=0 // pred_check_branch
    %24 = sbr.rel (0) target = $region21
  $region20: #{_lambda_.3} parent=0 // pred_region
    _
  $region21: #{_lambda_.3} parent=0 // pred_fallthru
    _
  // Predicated region
  $region22: #{_lambda_.3} parent=0 // pred_check
    _
  $region23: #{_lambda_.3} parent=0 // pred_check_branch
    %26 = sbr.rel (0) target = $region25
  $region24: #{_lambda_.3} parent=0 // pred_region
    _
  $region25: #{_lambda_.3} parent=0 // pred_fallthru
    _
  // Predicated region
  $region26: #{_lambda_.3} parent=0 // pred_check
    _
  $region27: #{_lambda_.3} parent=0 // pred_check_branch
    %28 = sbr.rel (0) target = $region29
  $region28: #{_lambda_.3} parent=0 // pred_region
    _
  $region29: #{_lambda_.3} parent=0 // pred_fallthru
    _
  // Predicated region
  $region30: #{_lambda_.3} parent=0 // pred_check
    _
  $region31: #{_lambda_.3} parent=0 // pred_check_branch
    %30 = sbr.rel (0) target = $region33
  $region32: #{_lambda_.3} parent=0 // pred_region
    _
  $region33: #{_lambda_.3} parent=0 // pred_fallthru
    _
  // Predicated region
  $region34: #{_lambda_.3} parent=0 // pred_check
    _
  $region35: #{_lambda_.3} parent=0 // pred_check_branch
    %32 = sbr.rel (0) target = $region37
  $region36: #{_lambda_.3} parent=0 // pred_region
    _
  $region37: #{_lambda_.3} parent=0 // pred_fallthru
    _
  // Predicated region
  $region38: #{_lambda_.3} parent=0 // pred_check
    _
  $region39: #{_lambda_.3} parent=0 // pred_check_branch
    %34 = sbr.rel (0) target = $region41
  $region40: #{_lambda_.3} parent=0 // pred_region
    _
  $region41: #{_lambda_.3} parent=0 // pred_fallthru
    _
  %v36 = vld [vmem:[%s0] sm:$0xff]
  %v37 = vld [vmem:[%s0 + $0x8] sm:$0xff]
  %v38 = vld [vmem:[%s1] sm:$0x1]
  %vm39 = vcmask 261120
  %v40 = vsel %vm39, %v36, 0.0
  %41 = vadd.xlane.f32.xlu0 %v40
  %v42 = vpop.xlane.xlu0 %41
  %v43 = vsel %vm39, %v37, 0.0
  %44 = vadd.xlane.f32.xlu0 %v43
  %v45 = vpop.xlane.xlu0 %44
  %v46 = vrcp.pop 32.0
  %v47 = vmul.f32 32.0, %v46
  %v48 = vsub.f32 1.0, %v47
  %v49 = vmul.f32 %v46, %v48
  %v50 = vadd.f32 %v46, %v49
  %vm51 = vweird.f32 %v46
  %v52 = vsel %vm51, %v46, %v50
  %v53 = vmul.f32 %v42, %v52
  %v54 = vmul.f32 %v45, %v52
  %v55 = vsub.f32 %v36, %v53
  %v56 = vsub.f32 %v37, %v54
  %v57 = vmul.f32 %v55, %v55
  %v58 = vmul.f32 %v56, %v56
  %v59 = vsel %vm39, %v57, 0.0
  %60 = vadd.xlane.f32.xlu0 %v59
  %v61 = vpop.xlane.xlu0 %60
  %v62 = vsel %vm39, %v58, 0.0
  %63 = vadd.xlane.f32.xlu0 %v62
  %v64 = vpop.xlane.xlu0 %63
  %v65 = vmul.f32 %v61, %v52
  %v66 = vmul.f32 %v64, %v52
  %v67 = vadd.f32 %v65, 1e-05
  %v68 = vadd.f32 %v66, 1e-05
  %v69 = vrsqrt.pop %v67
  %v70 = vmul.f32 %v69, %v67
  %v71 = vmul.f32 %v70, %v69
  %v72 = vmul.f32 0.5, %v71
  %v73 = vsub.f32 1.5, %v72
  %v74 = vmul.f32 %v69, %v73
  %vm75 = vweird.f32 %v67
  %vm76 = vweird.f32 %v69
  %vm77 = vmor %vm75, %vm76
  %v78 = vsel %vm77, %v69, %v74
  %v79 = vrsqrt.pop %v68
  %v80 = vmul.f32 %v79, %v68
  %v81 = vmul.f32 %v80, %v79
  %v82 = vmul.f32 0.5, %v81
  %v83 = vsub.f32 1.5, %v82
  %v84 = vmul.f32 %v79, %v83
  %vm85 = vweird.f32 %v68
  %vm86 = vweird.f32 %v79
  %vm87 = vmor %vm85, %vm86
  %v88 = vsel %vm87, %v79, %v84
  %v89 = vmul.f32 %v55, %v78
  %v90 = vmul.f32 %v56, %v88
  %v92 = vperm.slane %v38, 0
  %v94 = vmul.f32 %v89, %v92
  %v95 = vmul.f32 %v90, %v92
  %96 = vrot.lane.b32.xlu0 %v92, 96
  %v97 = vpop.permute.xlu0 %96
  %v99 = vadd.f32 %v94, %v97
  %v100 = vadd.f32 %v95, %v97
  %v101 = vld [vmem:[%s2] sm:$0xf]
  %v102 = vld [vmem:[%s2 + $0x4] sm:$0xf]
  %v103 = vld [vmem:[%s2 + $0x8] sm:$0xf]
  %v104 = vld [vmem:[%s2 + $0xc] sm:$0xf]
  %v105 = vpack.c.bf16 %v100, %v99
  %v110 = vunpack.c.l.b16 %v101
  %v111 = vunpack.c.l.b16 %v102
  %v112 = vunpack.c.l.b16 %v103
  %v113 = vunpack.c.l.b16 %v104
  %v114 = vpack.c.b16 %v111, %v110
  %v115 = vpack.c.b16 %v113, %v112
  %v119 = vsel %vm39, %v105, 0
  %121 = vmatpush.bf16.msra.mxu0 0
  %122 = vmatpush.bf16.msra.mxu0 0
  %123 = vmatpush.bf16.msra.mxu0 0
  %124 = vmatpush.bf16.msra.mxu0 0
  %125 = vmatpush.bf16.msra.mxu0 0
  %126 = vmatpush.bf16.msra.mxu0 0
  %127 = vmatpush.bf16.msra.mxu0 %v115
  %128 = vmatpush.bf16.msra.mxu0 %v114
  %129 = vmatmul.bf16.gmra.mxu0 %v119
  %v130 = vpop.f32.mrf.mxu0
  %v131 = vadd.f32 0.0, %v130
  %v132 = vpop.f32.mrf.mxu0
  %v133 = vadd.f32 0.0, %v132
  %134 = vdwg.mxu0
  %v135 = vlaneseq
  %v136 = vshrl.u32 %v135, 7
  %v137 = vadd.s32 %v136, 8
  %vm138 = vcmp.lt.s32.totalorder %v136, 0
  %v139 = vsub.s32 0, %v136
  %v140 = vsel %vm138, %v139, %v136
  %v141 = vshrl.u32 %v140, 3
  %v142 = vand.u32 %v140, 7
  %v143 = vsub.s32 0, %v142
  %v144 = vsel %vm138, %v143, %v142
  %vm145 = vcmp.lt.s32.totalorder %v137, 0
  %v146 = vsub.s32 0, %v137
  %v147 = vsel %vm145, %v146, %v137
  %v148 = vshrl.u32 %v147, 3
  %v149 = vand.u32 %v147, 7
  %v150 = vsub.s32 0, %v149
  %v151 = vsel %vm145, %v150, %v149
  %vm152 = vcmp.ne.s32.totalorder %v144, 0
  %vm153 = vcmp.ne.s32.totalorder %v151, 0
  %vm154 = vcmp.lt.s32.totalorder %v144, 0
  %vm155 = vcmp.lt.s32.totalorder %v151, 0
  %vm156 = vmand %vm154, %vm152
  %vm157 = vmand %vm155, %vm153
  %v158 = vadd.s32 %v144, 8
  %v159 = vadd.s32 %v151, 8
  %v160 = vsel %vm156, %v158, %v144
  %v161 = vsel %vm157, %v159, %v151
  %vm164 = vcmask 1042432
  %v165 = vrot.slane %v131, 5
  %v166 = vrot.slane %v133, 5
  %v167 = vsel %vm164, %v165, %v166
  %v171 = vsel %vm164, 0.0, %v165
  %v172 = vld [vmem:[%s3] sm:$0xf]
  %v173 = vadd.f32 %v92, 0.0
  %vm174 = vcmp.ge.s32.totalorder %v160, 3
  %vm175 = vcmp.ge.s32.totalorder %v161, 3
  %v176 = vsel %vm174, %v171, 0.0
  %v177 = vsel %vm175, %v167, 0.0
  %v178 = vperm.slane %v172, 0
  %v179 = vmul.f32 %v176, %v178
  %v180 = vmul.f32 %v177, %v178
  %183 = vrot.lane.b32.xlu0 %v179, 64
  %v184 = vpop.permute.xlu0 %183
  %185 = vrot.lane.b32.xlu0 %v180, 64
  %v186 = vpop.permute.xlu0 %185
  %v189 = vadd.f32 %v173, %v184
  %v190 = vadd.f32 %v173, %v186
  %vm191 = vcmp.ge.s32.totalorder %v160, 2
  %vm192 = vcmp.ge.s32.totalorder %v161, 2
  %vm194 = vcmask 1046528
  %v195 = vrot.slane %v171, 1
  %v196 = vrot.slane %v167, 1
  %v197 = vsel %vm194, %v195, %v196
  %v198 = vrot.slane %v166, 1
  %v199 = vsel %vm194, %v196, %v198
  %v202 = vsel %vm191, %v197, 0.0
  %v203 = vsel %vm192, %v199, 0.0
  %v204 = vperm.slane %v172, 1
  %v205 = vmul.f32 %v202, %v204
  %v206 = vmul.f32 %v203, %v204
  %209 = vrot.lane.b32.xlu0 %v205, 64
  %v210 = vpop.permute.xlu0 %209
  %211 = vrot.lane.b32.xlu0 %v206, 64
  %v212 = vpop.permute.xlu0 %211
  %v215 = vadd.f32 %v189, %v210
  %v216 = vadd.f32 %v190, %v212
  %vm217 = vcmp.ge.s32.totalorder %v160, 1
  %vm218 = vcmp.ge.s32.totalorder %v161, 1
  %vm219 = vcmask 1045504
  %v220 = vrot.slane %v171, 2
  %v221 = vrot.slane %v167, 2
  %v222 = vsel %vm219, %v220, %v221
  %v223 = vrot.slane %v166, 2
  %v224 = vsel %vm219, %v221, %v223
  %v227 = vsel %vm217, %v222, 0.0
  %v228 = vsel %vm218, %v224, 0.0
  %v229 = vperm.slane %v172, 2
  %v230 = vmul.f32 %v227, %v229
  %v231 = vmul.f32 %v228, %v229
  %234 = vrot.lane.b32.xlu0 %v230, 64
  %v235 = vpop.permute.xlu0 %234
  %236 = vrot.lane.b32.xlu0 %v231, 64
  %v237 = vpop.permute.xlu0 %236
  %v240 = vadd.f32 %v215, %v235
  %v241 = vadd.f32 %v216, %v237
  %v242 = vperm.slane %v172, 3
  %v243 = vmul.f32 %v171, %v242
  %v244 = vmul.f32 %v167, %v242
  %v245 = vmul.f32 %v166, %v242
  %vm249 = vcmask 1044480
  %v250 = vrot.slane %v243, 3
  %v251 = vrot.slane %v244, 3
  %v252 = vsel %vm249, %v250, %v251
  %v253 = vrot.slane %v245, 3
  %v254 = vsel %vm249, %v251, %v253
  %255 = vrot.lane.b32.xlu0 %v252, 64
  %v256 = vpop.permute.xlu0 %255
  %257 = vrot.lane.b32.xlu0 %v254, 64
  %v258 = vpop.permute.xlu0 %257
  %v261 = vadd.f32 %v240, %v256
  %v262 = vadd.f32 %v241, %v258
  %v263 = vand.u32 2147483647, %v261
  %v264 = vand.u32 2147483647, %v262
  %v265 = vsub.f32 0.0, %v263
  %v266 = vsub.f32 0.0, %v264
  %v267 = vmul.f32 %v265, 1.442695
  %v268 = vpow.pop %v267
  %v269 = vmul.f32 %v266, 1.442695
  %v270 = vpow.pop %v269
  %v271 = vadd.f32 %v268, 1.0
  %v272 = vadd.f32 %v270, 1.0
  %v273 = vrcp.pop %v271
  %v274 = vrcp.pop %v272
  %vm275 = vcmp.ge.f32.partialorder %v261, 0.0
  %vm276 = vcmp.ge.f32.partialorder %v262, 0.0
  %v277 = vmul.f32 %v268, %v273
  %v278 = vmul.f32 %v270, %v274
  %v279 = vsel %vm275, %v273, %v277
  %v280 = vsel %vm276, %v274, %v278
  %v281 = vmul.f32 %v261, %v279
  %v282 = vmul.f32 %v262, %v280
  %v283 = vld [vmem:[%s4] sm:$0xff]
  %v284 = vld [vmem:[%s4 + $0x8] sm:$0xff]
  %v285 = vld [vmem:[%s4 + $0x10] sm:$0xff]
  %v286 = vld [vmem:[%s4 + $0x18] sm:$0xff]
  %v287 = vld [vmem:[%s4 + $0x20] sm:$0xff]
  %v288 = vld [vmem:[%s4 + $0x28] sm:$0xff]
  %v289 = vld [vmem:[%s4 + $0x30] sm:$0xff]
  %v290 = vld [vmem:[%s4 + $0x38] sm:$0xff]
  %293 = vrot.lane.b32.xlu0 %v281, 64
  %v294 = vpop.permute.xlu0 %293
  %295 = vrot.lane.b32.xlu0 %v282, 64
  %v296 = vpop.permute.xlu0 %295
  %vm297 = vcmask 523264
  %v298 = vsel %vm297, %v294, 0
  %v300 = vsel %vm297, %v296, 0
  %302 = vmatpush.msra.mxu0 0.0
  %303 = vmatpush.msra.mxu0 0.0
  %304 = vmatpush.msra.mxu0 0.0
  %305 = vmatpush.msra.mxu0 0.0
  %306 = vmatpush.msra.mxu0 0.0
  %307 = vmatpush.msra.mxu0 0.0
  %308 = vmatpush.msra.mxu0 0.0
  %309 = vmatpush.msra.mxu0 0.0
  %310 = vmatpush.msra.mxu0 %v290
  %311 = vmatpush.msra.mxu0 %v289
  %312 = vmatpush.msra.mxu0 %v288
  %313 = vmatpush.msra.mxu0 %v287
  %314 = vmatpush.msra.mxu0 %v286
  %315 = vmatpush.msra.mxu0 %v285
  %316 = vmatpush.msra.mxu0 %v284
  %317 = vmatpush.msra.mxu0 %v283
  %318 = vmatmul.f32.gmra.mxu0 %v298
  %v319 = vpop.f32.mrf.mxu0
  %v320 = vadd.f32 0.0, %v319
  %321 = vmatmul.f32.gmra.mxu0 %v300
  %v322 = vpop.f32.mrf.mxu0
  %v323 = vadd.f32 0.0, %v322
  %324 = vdwg.mxu0
  %v325 = vld [vmem:[%s5] sm:$0x3]
  %v326 = vld [vmem:[%s1 + $0x1] sm:$0x1]
  %v328 = vperm.slane %v326, 0
  %vm330 = vcmask 15360
  %v332 = vsel %vm330, %v320, 0
  %v335 = vsel %vm330, %v323, 0
  %vm337 = vcmask 1041408
  %v339 = vsel %vm337, %v325, 0
  %341 = vmatpush.msra.mxu0 0.0
  %342 = vmatpush.msra.mxu0 0.0
  %343 = vmatpush.msra.mxu0 0.0
  %344 = vmatpush.msra.mxu0 0.0
  %345 = vmatpush.msra.mxu0 0.0
  %346 = vmatpush.msra.mxu0 0.0
  %347 = vmatpush.msra.mxu0 0.0
  %348 = vmatpush.msra.mxu0 0.0
  %349 = vmatpush.msra.mxu0 0.0
  %350 = vmatpush.msra.mxu0 0.0
  %351 = vmatpush.msra.mxu0 0.0
  %352 = vmatpush.msra.mxu0 0.0
  %353 = vmatpush.msra.mxu0 0.0
  %354 = vmatpush.msra.mxu0 0.0
  %355 = vmatpush.msra.mxu0 0.0
  %356 = vmatpush.msra.mxu0 %v339
  %357 = vmatmul.f32.gmra.mxu0 %v332
  %v358 = vpop.f32.mrf.mxu0
  %v359 = vadd.f32 %v328, %v358
  %360 = vmatmul.f32.gmra.mxu0 %v335
  %v361 = vpop.f32.mrf.mxu0
  %v362 = vadd.f32 %v328, %v361
  %363 = vdwg.mxu0
  %v364 = vmax.f32 %v359, 0.0
  %v365 = vmax.f32 %v362, 0.0
  %v366 = vand.u32 2147483647, %v359
  %v367 = vand.u32 2147483647, %v362
  %v368 = vsub.f32 0.0, %v366
  %v369 = vsub.f32 0.0, %v367
  %v370 = vmul.f32 %v368, 1.442695
  %v371 = vpow.pop %v370
  %v372 = vmul.f32 %v369, 1.442695
  %v373 = vpow.pop %v372
  %v374 = vadd.f32 %v371, 1.0
  %v375 = vadd.f32 %v373, 1.0
  %v376 = vlog2.pop %v374
  %v377 = vmul.f32 %v376, 0.6931472
  %v378 = vlog2.pop %v375
  %v379 = vmul.f32 %v378, 0.6931472
  %v380 = vadd.f32 %v364, %v377
  %v381 = vadd.f32 %v365, %v379
  %v382 = vld [vmem:[%s6] sm:$0xf]
  %v385 = vmul.f32 %v380, %v294
  %v386 = vmul.f32 %v381, %v296
  %v387 = vperm.slane %v382, 0
  %v388 = vmul.f32 %v380, %v387
  %v389 = vmul.f32 %v381, %v387
  %v390 = vmul.f32 %v388, 1.442695
  %v391 = vpow.pop %v390
  %v392 = vmul.f32 %v389, 1.442695
  %v393 = vpow.pop %v392
  %v394 = vperm.slane %v382, 1
  %v395 = vmul.f32 %v380, %v394
  %v396 = vmul.f32 %v381, %v394
  %v397 = vmul.f32 %v395, 1.442695
  %v398 = vpow.pop %v397
  %v399 = vmul.f32 %v396, 1.442695
  %v400 = vpow.pop %v399
  %v401 = vperm.slane %v382, 2
  %v402 = vmul.f32 %v380, %v401
  %v403 = vmul.f32 %v381, %v401
  %v404 = vmul.f32 %v402, 1.442695
  %v405 = vpow.pop %v404
  %v406 = vmul.f32 %v403, 1.442695
  %v407 = vpow.pop %v406
  %v408 = vperm.slane %v382, 3
  %v409 = vmul.f32 %v380, %v408
  %v410 = vmul.f32 %v381, %v408
  %v411 = vmul.f32 %v409, 1.442695
  %v412 = vpow.pop %v411
  %v413 = vmul.f32 %v410, 1.442695
  %v414 = vpow.pop %v413
  %417 = vrot.lane.b32.xlu0 %v398, 64
  %v418 = vpop.permute.xlu0 %417
  %419 = vrot.lane.b32.xlu0 %v400, 64
  %v420 = vpop.permute.xlu0 %419
  %425 = vrot.lane.b32.xlu0 %v412, 64
  %v426 = vpop.permute.xlu0 %425
  %427 = vrot.lane.b32.xlu0 %v414, 64
  %v428 = vpop.permute.xlu0 %427
  %v431 = vsel %vm297, %v391, %v418
  %v432 = vsel %vm297, %v393, %v420
  %v433 = vsel %vm297, %v405, %v426
  %v434 = vsel %vm297, %v407, %v428
  %435 = vst [vmem:[#allocation2] sm:$0xff] %v431
  %436 = vst [vmem:[#allocation2 + $0x8] sm:$0xff] %v433
  %437 = vst [vmem:[#allocation2 + $0x10] sm:$0xff] %v432
  %438 = vst [vmem:[#allocation2 + $0x18] sm:$0xff] %v434
  %439 = vset.pattern.permute.xlu0 2
  %440 = vperm.xlu0 %439, %v320
  %v441 = vpop.permute.xlu0 %440
  %443 = vset.pattern.permute.xlu0 2
  %444 = vperm.xlu0 %443, %v323
  %v445 = vpop.permute.xlu0 %444
  %v447 = vmul.f32 %v385, %v441
  %v448 = vmul.f32 %v386, %v445
  %449 = vset.pattern.permute.xlu0 3
  %450 = vperm.xlu0 %449, %v320
  %v451 = vpop.permute.xlu0 %450
  %453 = vset.pattern.permute.xlu0 3
  %454 = vperm.xlu0 %453, %v323
  %v455 = vpop.permute.xlu0 %454
  %v457 = vmul.f32 %v385, %v451
  %v458 = vmul.f32 %v386, %v455
  %459 = vset.pattern.permute.xlu0 4
  %460 = vperm.xlu0 %459, %v320
  %v461 = vpop.permute.xlu0 %460
  %463 = vset.pattern.permute.xlu0 4
  %464 = vperm.xlu0 %463, %v323
  %v465 = vpop.permute.xlu0 %464
  %v467 = vmul.f32 %v385, %v461
  %v468 = vmul.f32 %v386, %v465
  %469 = vset.pattern.permute.xlu0 5
  %470 = vperm.xlu0 %469, %v320
  %v471 = vpop.permute.xlu0 %470
  %473 = vset.pattern.permute.xlu0 5
  %474 = vperm.xlu0 %473, %v323
  %v475 = vpop.permute.xlu0 %474
  %v477 = vmul.f32 %v385, %v471
  %v478 = vmul.f32 %v386, %v475
  %481 = vrot.lane.b32.xlu0 %v457, 64
  %v482 = vpop.permute.xlu0 %481
  %483 = vrot.lane.b32.xlu0 %v458, 64
  %v484 = vpop.permute.xlu0 %483
  %489 = vrot.lane.b32.xlu0 %v477, 64
  %v490 = vpop.permute.xlu0 %489
  %491 = vrot.lane.b32.xlu0 %v478, 64
  %v492 = vpop.permute.xlu0 %491
  %v495 = vsel %vm297, %v447, %v482
  %v496 = vsel %vm297, %v448, %v484
  %v497 = vsel %vm297, %v467, %v490
  %v498 = vsel %vm297, %v468, %v492
  %499 = vst [vmem:[#allocation3] sm:$0xff] %v495
  %500 = vst [vmem:[#allocation3 + $0x8] sm:$0xff] %v497
  %501 = vst [vmem:[#allocation3 + $0x10] sm:$0xff] %v496
  %502 = vst [vmem:[#allocation3 + $0x18] sm:$0xff] %v498
  %503 = vrot.lane.b32.xlu0 %v320, 122
  %v504 = vpop.permute.xlu0 %503
  %505 = vrot.lane.b32.xlu0 %v323, 122
  %v506 = vpop.permute.xlu0 %505
  %vm509 = vcmask 31744
  %510 = vst.msk [vmem:[#allocation4] sm:$0xff] %vm509, %v504
  %511 = vst.msk [vmem:[#allocation4 + $0x8] sm:$0xff] %vm509, %v506
  %s512 = smul.u32 0, 2
  %s513 = smul.addr %s512, 8
  %s514 = scalar_lea.vmem [#allocation2], %s513
  %v515 = vld [vmem:[%s514] sm:$0xff]
  %v516 = vld [vmem:[%s514 + $0x8] sm:$0xff]
  %s517 = smul.addr %s512, 8
  %s518 = scalar_lea.vmem [#allocation3], %s517
  %v519 = vld [vmem:[%s518] sm:$0xff]
  %v520 = vld [vmem:[%s518 + $0x8] sm:$0xff]
  %v521 = vld [vmem:[#allocation4] sm:$0xff]
  %v522 = vmul.f32 %v515, 0.0
  %v523 = vmul.f32 %v516, 0.0
  %v524 = vadd.f32 %v522, %v519
  %v525 = vadd.f32 %v523, %v520
  %v528 = vrot.slane %v524, 7
  %v529 = vrot.slane %v525, 7
  %v532 = vmul.f32 %v515, %v528
  %v533 = vmul.f32 %v516, %v529
  %v534 = vadd.f32 %v532, %v519
  %v535 = vadd.f32 %v533, %v520
  %v538 = vrot.slane %v534, 7
  %v539 = vrot.slane %v535, 7
  %v542 = vmul.f32 %v515, %v538
  %v543 = vmul.f32 %v516, %v539
  %v544 = vadd.f32 %v542, %v519
  %v545 = vadd.f32 %v543, %v520
  %v548 = vrot.slane %v544, 7
  %v549 = vrot.slane %v545, 7
  %v552 = vmul.f32 %v515, %v548
  %v553 = vmul.f32 %v516, %v549
  %v554 = vadd.f32 %v552, %v519
  %v555 = vadd.f32 %v553, %v520
  %v558 = vrot.slane %v554, 7
  %v559 = vrot.slane %v555, 7
  %v562 = vmul.f32 %v515, %v558
  %v563 = vmul.f32 %v516, %v559
  %v564 = vadd.f32 %v562, %v519
  %v565 = vadd.f32 %v563, %v520
  %v568 = vrot.slane %v564, 7
  %v569 = vrot.slane %v565, 7
  %v572 = vmul.f32 %v515, %v568
  %v573 = vmul.f32 %v516, %v569
  %v574 = vadd.f32 %v572, %v519
  %v575 = vadd.f32 %v573, %v520
  %v578 = vrot.slane %v574, 7
  %v579 = vrot.slane %v575, 7
  %v582 = vmul.f32 %v515, %v578
  %v583 = vmul.f32 %v516, %v579
  %v584 = vadd.f32 %v582, %v519
  %v585 = vadd.f32 %v583, %v520
  %v588 = vrot.slane %v584, 7
  %v589 = vrot.slane %v585, 7
  %v592 = vmul.f32 %v515, %v588
  %v593 = vmul.f32 %v516, %v589
  %v594 = vadd.f32 %v592, %v519
  %v595 = vadd.f32 %v593, %v520
  %vm596 = vcmask 1040384
  %v597 = vsel %vm596, %v524, %v534
  %v598 = vsel %vm596, %v525, %v535
  %v599 = vsel %vm337, %v597, %v544
  %v600 = vsel %vm337, %v598, %v545
  %v601 = vsel %vm164, %v599, %v554
  %v602 = vsel %vm164, %v600, %v555
  %vm603 = vcmask 1043456
  %v604 = vsel %vm603, %v601, %v564
  %v605 = vsel %vm603, %v602, %v565
  %v606 = vsel %vm249, %v604, %v574
  %v607 = vsel %vm249, %v605, %v575
  %v608 = vsel %vm219, %v606, %v584
  %v609 = vsel %vm219, %v607, %v585
  %v610 = vsel %vm194, %v608, %v594
  %v611 = vsel %vm194, %v609, %v595
  %613 = vset.pattern.permute.xlu0 0
  %614 = vperm.xlu0 %613, %v521
  %v615 = vpop.permute.xlu0 %614
  %v617 = vmul.f32 %v610, %v615
  %v618 = vadd.f32 %v617, 0.0
  %619 = vset.pattern.permute.xlu0 1
  %620 = vperm.xlu0 %619, %v521
  %v621 = vpop.permute.xlu0 %620
  %v623 = vmul.f32 %v610, %v621
  %625 = vrot.lane.b32.xlu0 %v623, 64
  %v626 = vpop.permute.xlu0 %625
  %v628 = vadd.f32 %v618, %v626
  %629 = vset.pattern.permute.xlu0 2
  %630 = vperm.xlu0 %629, %v521
  %v631 = vpop.permute.xlu0 %630
  %v633 = vmul.f32 %v611, %v631
  %v634 = vadd.f32 %v628, %v633
  %635 = vset.pattern.permute.xlu0 3
  %636 = vperm.xlu0 %635, %v521
  %v637 = vpop.permute.xlu0 %636
  %v639 = vmul.f32 %v611, %v637
  %641 = vrot.lane.b32.xlu0 %v639, 64
  %v642 = vpop.permute.xlu0 %641
  %v644 = vadd.f32 %v634, %v642
  %645 = vst.msk [vmem:[#allocation5] sm:$0xff] %vm297, %v644
  %s646 = smul.u32 1, 2
  %s647 = smul.addr %s646, 8
  %s648 = scalar_lea.vmem [#allocation2], %s647
  %v649 = vld [vmem:[%s648] sm:$0xff]
  %v650 = vld [vmem:[%s648 + $0x8] sm:$0xff]
  %s651 = smul.addr %s646, 8
  %s652 = scalar_lea.vmem [#allocation3], %s651
  %v653 = vld [vmem:[%s652] sm:$0xff]
  %v654 = vld [vmem:[%s652 + $0x8] sm:$0xff]
  %s655 = scalar_lea.vmem [#allocation4], 8
  %v656 = vld [vmem:[%s655] sm:$0xff]
  %v657 = vmul.f32 %v649, 0.0
  %v658 = vmul.f32 %v650, 0.0
  %v659 = vadd.f32 %v657, %v653
  %v660 = vadd.f32 %v658, %v654
  %v663 = vrot.slane %v659, 7
  %v664 = vrot.slane %v660, 7
  %v667 = vmul.f32 %v649, %v663
  %v668 = vmul.f32 %v650, %v664
  %v669 = vadd.f32 %v667, %v653
  %v670 = vadd.f32 %v668, %v654
  %v673 = vrot.slane %v669, 7
  %v674 = vrot.slane %v670, 7
  %v677 = vmul.f32 %v649, %v673
  %v678 = vmul.f32 %v650, %v674
  %v679 = vadd.f32 %v677, %v653
  %v680 = vadd.f32 %v678, %v654
  %v683 = vrot.slane %v679, 7
  %v684 = vrot.slane %v680, 7
  %v687 = vmul.f32 %v649, %v683
  %v688 = vmul.f32 %v650, %v684
  %v689 = vadd.f32 %v687, %v653
  %v690 = vadd.f32 %v688, %v654
  %v693 = vrot.slane %v689, 7
  %v694 = vrot.slane %v690, 7
  %v697 = vmul.f32 %v649, %v693
  %v698 = vmul.f32 %v650, %v694
  %v699 = vadd.f32 %v697, %v653
  %v700 = vadd.f32 %v698, %v654
  %v703 = vrot.slane %v699, 7
  %v704 = vrot.slane %v700, 7
  %v707 = vmul.f32 %v649, %v703
  %v708 = vmul.f32 %v650, %v704
  %v709 = vadd.f32 %v707, %v653
  %v710 = vadd.f32 %v708, %v654
  %v713 = vrot.slane %v709, 7
  %v714 = vrot.slane %v710, 7
  %v717 = vmul.f32 %v649, %v713
  %v718 = vmul.f32 %v650, %v714
  %v719 = vadd.f32 %v717, %v653
  %v720 = vadd.f32 %v718, %v654
  %v723 = vrot.slane %v719, 7
  %v724 = vrot.slane %v720, 7
  %v727 = vmul.f32 %v649, %v723
  %v728 = vmul.f32 %v650, %v724
  %v729 = vadd.f32 %v727, %v653
  %v730 = vadd.f32 %v728, %v654
  %v731 = vsel %vm596, %v659, %v669
  %v732 = vsel %vm596, %v660, %v670
  %v733 = vsel %vm337, %v731, %v679
  %v734 = vsel %vm337, %v732, %v680
  %v735 = vsel %vm164, %v733, %v689
  %v736 = vsel %vm164, %v734, %v690
  %v737 = vsel %vm603, %v735, %v699
  %v738 = vsel %vm603, %v736, %v700
  %v739 = vsel %vm249, %v737, %v709
  %v740 = vsel %vm249, %v738, %v710
  %v741 = vsel %vm219, %v739, %v719
  %v742 = vsel %vm219, %v740, %v720
  %v743 = vsel %vm194, %v741, %v729
  %v744 = vsel %vm194, %v742, %v730
  %746 = vset.pattern.permute.xlu0 0
  %747 = vperm.xlu0 %746, %v656
  %v748 = vpop.permute.xlu0 %747
  %v750 = vmul.f32 %v743, %v748
  %v751 = vadd.f32 %v750, 0.0
  %752 = vset.pattern.permute.xlu0 1
  %753 = vperm.xlu0 %752, %v656
  %v754 = vpop.permute.xlu0 %753
  %v756 = vmul.f32 %v743, %v754
  %758 = vrot.lane.b32.xlu0 %v756, 64
  %v759 = vpop.permute.xlu0 %758
  %v761 = vadd.f32 %v751, %v759
  %762 = vset.pattern.permute.xlu0 2
  %763 = vperm.xlu0 %762, %v656
  %v764 = vpop.permute.xlu0 %763
  %v766 = vmul.f32 %v744, %v764
  %v767 = vadd.f32 %v761, %v766
  %768 = vset.pattern.permute.xlu0 3
  %769 = vperm.xlu0 %768, %v656
  %v770 = vpop.permute.xlu0 %769
  %v772 = vmul.f32 %v744, %v770
  %774 = vrot.lane.b32.xlu0 %v772, 64
  %v775 = vpop.permute.xlu0 %774
  %v777 = vadd.f32 %v767, %v775
  %s778 = scalar_lea.vmem [#allocation5], 8
  %779 = vst.msk [vmem:[%s778] sm:$0xff] %vm297, %v777
  %v780 = vld [vmem:[#allocation5] sm:$0xff]
  %v781 = vld [vmem:[#allocation5 + $0x8] sm:$0xff]
  %v782 = vld [vmem:[%s1 + $0x1] sm:$0x1]
  %v784 = vperm.slane %v782, 0
  %v786 = vmul.f32 %v281, %v784
  %v787 = vmul.f32 %v282, %v784
  %790 = vrot.lane.b32.xlu0 %v786, 64
  %v791 = vpop.permute.xlu0 %790
  %792 = vrot.lane.b32.xlu0 %v787, 64
  %v793 = vpop.permute.xlu0 %792
  %v796 = vadd.f32 %v780, %v791
  %v797 = vadd.f32 %v781, %v793
  %v798 = vand.u32 2147483647, %v131
  %v799 = vand.u32 2147483647, %v133
  %v800 = vsub.f32 0.0, %v798
  %v801 = vsub.f32 0.0, %v799
  %v802 = vmul.f32 %v800, 1.442695
  %v803 = vpow.pop %v802
  %v804 = vmul.f32 %v801, 1.442695
  %v805 = vpow.pop %v804
  %v806 = vadd.f32 %v803, 1.0
  %v807 = vadd.f32 %v805, 1.0
  %v808 = vrcp.pop %v806
  %v809 = vrcp.pop %v807
  %vm810 = vcmp.ge.f32.partialorder %v131, 0.0
  %vm811 = vcmp.ge.f32.partialorder %v133, 0.0
  %v812 = vmul.f32 %v803, %v808
  %v813 = vmul.f32 %v805, %v809
  %v814 = vsel %vm810, %v808, %v812
  %v815 = vsel %vm811, %v809, %v813
  %v816 = vmul.f32 %v131, %v814
  %v817 = vmul.f32 %v133, %v815
  %820 = vrot.lane.b32.xlu0 %v816, 64
  %v821 = vpop.permute.xlu0 %820
  %822 = vrot.lane.b32.xlu0 %v817, 64
  %v823 = vpop.permute.xlu0 %822
  %v826 = vmul.f32 %v796, %v821
  %v827 = vmul.f32 %v797, %v823
  %v828 = vld [vmem:[%s7] sm:$0xf]
  %v829 = vld [vmem:[%s7 + $0x4] sm:$0xf]
  %v830 = vld [vmem:[%s7 + $0x8] sm:$0xf]
  %v831 = vld [vmem:[%s7 + $0xc] sm:$0xf]
  %v832 = vld [vmem:[%s7 + $0x10] sm:$0xf]
  %v833 = vld [vmem:[%s7 + $0x14] sm:$0xf]
  %v834 = vld [vmem:[%s7 + $0x18] sm:$0xf]
  %v835 = vld [vmem:[%s7 + $0x1c] sm:$0xf]
  %v836 = vpack.c.bf16 %v827, %v826
  %v845 = vunpack.c.l.b16 %v828
  %v846 = vunpack.c.l.b16 %v829
  %v847 = vunpack.c.l.b16 %v830
  %v848 = vunpack.c.l.b16 %v831
  %v849 = vunpack.c.l.b16 %v832
  %v850 = vunpack.c.l.b16 %v833
  %v851 = vunpack.c.l.b16 %v834
  %v852 = vunpack.c.l.b16 %v835
  %v853 = vpack.c.b16 %v846, %v845
  %v854 = vpack.c.b16 %v848, %v847
  %v855 = vpack.c.b16 %v850, %v849
  %v856 = vpack.c.b16 %v852, %v851
  %v862 = vsel %vm297, %v836, 0
  %864 = vmatpush.bf16.msra.mxu0 0
  %865 = vmatpush.bf16.msra.mxu0 0
  %866 = vmatpush.bf16.msra.mxu0 0
  %867 = vmatpush.bf16.msra.mxu0 0
  %868 = vmatpush.bf16.msra.mxu0 %v856
  %869 = vmatpush.bf16.msra.mxu0 %v855
  %870 = vmatpush.bf16.msra.mxu0 %v854
  %871 = vmatpush.bf16.msra.mxu0 %v853
  %872 = vmatmul.bf16.gmra.mxu0 %v862
  %v873 = vpop.f32.mrf.mxu0
  %v874 = vadd.f32 0.0, %v873
  %v875 = vpop.f32.mrf.mxu0
  %v876 = vadd.f32 0.0, %v875
  %877 = vdwg.mxu0
  %v878 = vadd.f32 %v36, %v874
  %v879 = vadd.f32 %v37, %v876
  %v880 = vld [vmem:[%s1 + $0x2] sm:$0x1]
  %v881 = vsel %vm39, %v878, 0.0
  %882 = vadd.xlane.f32.xlu0 %v881
  %v883 = vpop.xlane.xlu0 %882
  %v884 = vsel %vm39, %v879, 0.0
  %885 = vadd.xlane.f32.xlu0 %v884
  %v886 = vpop.xlane.xlu0 %885
  %v887 = vmul.f32 %v883, %v52
  %v888 = vmul.f32 %v886, %v52
  %v889 = vsub.f32 %v878, %v887
  %v890 = vsub.f32 %v879, %v888
  %v891 = vmul.f32 %v889, %v889
  %v892 = vmul.f32 %v890, %v890
  %v893 = vsel %vm39, %v891, 0.0
  %894 = vadd.xlane.f32.xlu0 %v893
  %v895 = vpop.xlane.xlu0 %894
  %v896 = vsel %vm39, %v892, 0.0
  %897 = vadd.xlane.f32.xlu0 %v896
  %v898 = vpop.xlane.xlu0 %897
  %v899 = vmul.f32 %v895, %v52
  %v900 = vmul.f32 %v898, %v52
  %v901 = vadd.f32 %v899, 1e-05
  %v902 = vadd.f32 %v900, 1e-05
  %v903 = vrsqrt.pop %v901
  %v904 = vmul.f32 %v903, %v901
  %v905 = vmul.f32 %v904, %v903
  %v906 = vmul.f32 0.5, %v905
  %v907 = vsub.f32 1.5, %v906
  %v908 = vmul.f32 %v903, %v907
  %vm909 = vweird.f32 %v901
  %vm910 = vweird.f32 %v903
  %vm911 = vmor %vm909, %vm910
  %v912 = vsel %vm911, %v903, %v908
  %v913 = vrsqrt.pop %v902
  %v914 = vmul.f32 %v913, %v902
  %v915 = vmul.f32 %v914, %v913
  %v916 = vmul.f32 0.5, %v915
  %v917 = vsub.f32 1.5, %v916
  %v918 = vmul.f32 %v913, %v917
  %vm919 = vweird.f32 %v902
  %vm920 = vweird.f32 %v913
  %vm921 = vmor %vm919, %vm920
  %v922 = vsel %vm921, %v913, %v918
  %v923 = vmul.f32 %v889, %v912
  %v924 = vmul.f32 %v890, %v922
  %v926 = vperm.slane %v880, 0
  %v928 = vmul.f32 %v923, %v926
  %v929 = vmul.f32 %v924, %v926
  %930 = vrot.lane.b32.xlu0 %v926, 96
  %v931 = vpop.permute.xlu0 %930
  %v933 = vadd.f32 %v928, %v931
  %v934 = vadd.f32 %v929, %v931
  %v935 = vld [vmem:[%s8] sm:$0xf]
  %v936 = vld [vmem:[%s8 + $0x4] sm:$0xf]
  %v937 = vld [vmem:[%s8 + $0x8] sm:$0xf]
  %v938 = vld [vmem:[%s8 + $0xc] sm:$0xf]
  %v939 = vpack.c.bf16 %v934, %v933
  %v940 = vld [vmem:[%s1 + $0x2] sm:$0x3]
  %v942 = vperm.slane %v940, 0
  %v943 = vperm.slane %v940, 1
  %v948 = vunpack.c.l.b16 %v935
  %v949 = vunpack.c.l.b16 %v936
  %v950 = vunpack.c.l.b16 %v937
  %v951 = vunpack.c.l.b16 %v938
  %v952 = vpack.c.b16 %v949, %v948
  %v953 = vpack.c.b16 %v951, %v950
  %956 = vrot.lane.b32.xlu0 %v942, 64
  %v957 = vpop.permute.xlu0 %956
  %958 = vrot.lane.b32.xlu0 %v943, 64
  %v959 = vpop.permute.xlu0 %958
  %v960 = vsel %vm297, %v957, %v959
  %v963 = vsel %vm39, %v939, 0
  %965 = vmatpush.bf16.msra.mxu0 0
  %966 = vmatpush.bf16.msra.mxu0 0
  %967 = vmatpush.bf16.msra.mxu0 0
  %968 = vmatpush.bf16.msra.mxu0 0
  %969 = vmatpush.bf16.msra.mxu0 0
  %970 = vmatpush.bf16.msra.mxu0 0
  %971 = vmatpush.bf16.msra.mxu0 %v953
  %972 = vmatpush.bf16.msra.mxu0 %v952
  %973 = vmatmul.bf16.gmra.mxu0 %v963
  %v974 = vpop.f32.mrf.mxu0
  %v975 = vadd.f32 %v960, %v974
  %v976 = vpop.f32.mrf.mxu0
  %v977 = vadd.f32 %v960, %v976
  %978 = vdwg.mxu0
  %v979 = vmax.f32 %v975, 0.0
  %v980 = vmax.f32 %v977, 0.0
  %v981 = vld [vmem:[%s9] sm:$0xf]
  %v982 = vld [vmem:[%s9 + $0x4] sm:$0xf]
  %v983 = vld [vmem:[%s9 + $0x8] sm:$0xf]
  %v984 = vld [vmem:[%s9 + $0xc] sm:$0xf]
  %v985 = vld [vmem:[%s9 + $0x10] sm:$0xf]
  %v986 = vld [vmem:[%s9 + $0x14] sm:$0xf]
  %v987 = vld [vmem:[%s9 + $0x18] sm:$0xf]
  %v988 = vld [vmem:[%s9 + $0x1c] sm:$0xf]
  %v989 = vld [vmem:[%s9 + $0x20] sm:$0xf]
  %v990 = vld [vmem:[%s9 + $0x24] sm:$0xf]
  %v991 = vld [vmem:[%s9 + $0x28] sm:$0xf]
  %v992 = vld [vmem:[%s9 + $0x2c] sm:$0xf]
  %v993 = vld [vmem:[%s9 + $0x30] sm:$0xf]
  %v994 = vld [vmem:[%s9 + $0x34] sm:$0xf]
  %v995 = vld [vmem:[%s9 + $0x38] sm:$0xf]
  %v996 = vld [vmem:[%s9 + $0x3c] sm:$0xf]
  %v997 = vpack.c.bf16 %v980, %v979
  %v1014 = vunpack.c.l.b16 %v981
  %v1015 = vunpack.c.l.b16 %v982
  %v1016 = vunpack.c.l.b16 %v983
  %v1017 = vunpack.c.l.b16 %v984
  %v1018 = vunpack.c.l.b16 %v985
  %v1019 = vunpack.c.l.b16 %v986
  %v1020 = vunpack.c.l.b16 %v987
  %v1021 = vunpack.c.l.b16 %v988
  %v1022 = vunpack.c.l.b16 %v989
  %v1023 = vunpack.c.l.b16 %v990
  %v1024 = vunpack.c.l.b16 %v991
  %v1025 = vunpack.c.l.b16 %v992
  %v1026 = vunpack.c.l.b16 %v993
  %v1027 = vunpack.c.l.b16 %v994
  %v1028 = vunpack.c.l.b16 %v995
  %v1029 = vunpack.c.l.b16 %v996
  %v1030 = vpack.c.b16 %v1015, %v1014
  %v1031 = vpack.c.b16 %v1017, %v1016
  %v1032 = vpack.c.b16 %v1019, %v1018
  %v1033 = vpack.c.b16 %v1021, %v1020
  %v1034 = vpack.c.b16 %v1023, %v1022
  %v1035 = vpack.c.b16 %v1025, %v1024
  %v1036 = vpack.c.b16 %v1027, %v1026
  %v1037 = vpack.c.b16 %v1029, %v1028
  %1046 = vmatpush.bf16.msra.mxu0 %v1037
  %1047 = vmatpush.bf16.msra.mxu0 %v1036
  %1048 = vmatpush.bf16.msra.mxu0 %v1035
  %1049 = vmatpush.bf16.msra.mxu0 %v1034
  %1050 = vmatpush.bf16.msra.mxu0 %v1033
  %1051 = vmatpush.bf16.msra.mxu0 %v1032
  %1052 = vmatpush.bf16.msra.mxu0 %v1031
  %1053 = vmatpush.bf16.msra.mxu0 %v1030
  %1054 = vmatmul.bf16.gmra.mxu0 %v997
  %v1055 = vpop.f32.mrf.mxu0
  %v1056 = vadd.f32 0.0, %v1055
  %v1057 = vpop.f32.mrf.mxu0
  %v1058 = vadd.f32 0.0, %v1057
  %1059 = vdwg.mxu0
  %v1060 = vadd.f32 %v878, %v1056
  %v1061 = vadd.f32 %v879, %v1058
  %v1062 = vld [vmem:[%s1 + $0x3] sm:$0x1]
  %v1064 = vperm.slane %v1062, 0
  %1065 = vrot.lane.b32.xlu0 %v1064, 64
  %v1066 = vpop.permute.xlu0 %1065
  %v1068 = vadd.f32 %v1060, %v1066
  %v1069 = vadd.f32 %v1061, %v1066
  %1070 = vst.msk [vmem:[%s10] sm:$0xff] %vm39, %v1068
  %1071 = vst.msk [vmem:[%s10 + $0x8] sm:$0xff] %vm39, %v1069
  // Predicated region
  $region42: #{_lambda_.3} parent=0 // pred_check
    _
  $region43: #{_lambda_.3} parent=0 // pred_check_branch
    %1073 = sbr.rel (0) target = $region45
  $region44: #{_lambda_.3} parent=0 // pred_region
    _
  $region45: #{_lambda_.3} parent=0 // pred_fallthru
    _
  // Predicated region
  $region46: #{_lambda_.3} parent=0 // pred_check
    _
  $region47: #{_lambda_.3} parent=0 // pred_check_branch
    %1075 = sbr.rel (0) target = $region49
  $region48: #{_lambda_.3} parent=0 // pred_region
    _
  $region49: #{_lambda_.3} parent=0 // pred_fallthru
    _

</llo_original>
